<compile_context>
chip_gen: v7x
topology: tpu7x:2x2x1
jax: 0.10.0
libtpu: 0.0.40
codegen_flags: <defaults>
</compile_context>

<pallas_src>
import functools

import jax
import jax.numpy as jnp
from jax import lax
from jax.experimental import pallas as pl
from jax.experimental.pallas import tpu as pltpu


# ----------------------------------------------------------------------------
# One-time weight preparation (hoist out of the per-call hot path)
# ----------------------------------------------------------------------------
def prep_decoder_weights(w_deconv, w_conv, in_width, dtype=jnp.bfloat16):
    """
    w_deconv : (Cin, Cout, 3, 3)         torch ConvTranspose2d weight layout
    w_conv   : (Cout, Cout+Cskip, 3, 3)  torch Conv2d weight layout
    in_width : w  (input spatial width; output width is W = 2*w)
    dtype    : storage/compute dtype of the banded weights (bf16 recommended;
               every matmul accumulates in f32 regardless)

    Banded weights so every conv becomes a lane-dense 2-D matmul on
    lane-flattened images (rows, width*channels):
      wdec : (3, w*Cin,   W*Cout)  [even rows | odd rows, same input row | odd rows, next row]
      wcd  : (3, W*Cout,  W*Cout)  fusion conv, deconv channels, one band per vertical tap
      wcs  : (3, W*Cskip, W*Cout)  fusion conv, skip channels,  one band per vertical tap
    """
    f32 = jnp.float32
    cin, cout = int(w_deconv.shape[0]), int(w_deconv.shape[1])
    w = int(in_width)
    W = 2 * w
    Wt = w_deconv.astype(f32)                 # Wt[c, o, ky, kx]
    W2 = w_conv.astype(f32)                   # W2[o, c, ky, kx]
    o_ch = int(W2.shape[0])

    # --- transpose conv (stride 2, pad 1, out_pad 1): sub-pixel decomposition.
    #   out[2i  , 2j  ] = x[i, j] . Wt[:,:,1,1]
    #   out[2i  , 2j+1] = x[i, j] . Wt[:,:,1,2] + x[i,   j+1] . Wt[:,:,1,0]
    #   out[2i+1, 2j  ] = x[i, j] . Wt[:,:,2,1] + x[i+1, j  ] . Wt[:,:,0,1]
    #   out[2i+1, 2j+1] = x[i, j] . Wt[:,:,2,2] + x[i,   j+1] . Wt[:,:,2,0]
    #                   + x[i+1, j] . Wt[:,:,0,2] + x[i+1, j+1] . Wt[:,:,0,0]
    S = jnp.zeros((3, w, W), f32)
    jj = jnp.arange(w)
    S = S.at[1, jj, 2 * jj].set(1.0)                          # s=2j   <- (j,   kx=1)
    S = S.at[2, jj, 2 * jj + 1].set(1.0)                      # s=2j+1 <- (j,   kx=2)
    S = S.at[0, jj[:-1] + 1, 2 * jj[:-1] + 1].set(1.0)        # s=2j+1 <- (j+1, kx=0)

    def deconv_band(ky):
        wt = jnp.transpose(Wt[:, :, ky, :], (2, 0, 1))        # (kx, cin, cout)
        return jnp.einsum('xjs,xco->jcso', S, wt).reshape(w * cin, W * cout)

    # even rows: ky=1; odd rows: ky=2 (same input row) + ky=0 (next input row)
    wdec = jnp.stack([deconv_band(1), deconv_band(2), deconv_band(0)], axis=0)

    # --- fusion conv (3x3, pad 1): one Toeplitz band per vertical tap (kx folded into K)
    eyes = jnp.stack([jnp.eye(W, W, k=1 - kx, dtype=f32) for kx in range(3)], axis=0)

    def conv_bands(Wpart):                                    # (o_ch, Cp, 3, 3)
        mats = []
        for ky in range(3):
            wt = jnp.transpose(Wpart[:, :, ky, :], (2, 1, 0))  # (kx, Cp, o_ch)
            mats.append(jnp.einsum('xjs,xco->jcso', eyes, wt)
                        .reshape(W * Wpart.shape[1], W * o_ch))
        return jnp.stack(mats, axis=0)

    wcd = conv_bands(W2[:, :cout])     # deconv-channel part of the concat
    wcs = conv_bands(W2[:, cout:])     # skip-channel part of the concat
    return wdec.astype(dtype), wcd.astype(dtype), wcs.astype(dtype)


# ----------------------------------------------------------------------------
# Fused Pallas kernel: block_batch images per grid step, image-major rows
# ----------------------------------------------------------------------------
def _make_kernel(h, H, cdtype):
    neg = 0.1  # LeakyReLU negative slope used by the module

    def kernel(x_ref, skip_ref, wdec_ref, wcd_ref, wcs_ref, o_ref):
        f32 = jnp.float32
        Mi, wcin = x_ref.shape             # Mi = block_batch * h
        Mo, wcout = o_ref.shape            # Mo = block_batch * H   (H = 2h)
        _, wskip = skip_ref.shape

        # ---- transpose conv (sub-pixel): K = w*Cin, lane-dense N = W*Cout ----
        x2d = x_ref[...]                                               # cdtype
        # x[i+1, :] within each image; zero at each image's last row (output_padding)
        keep_last = jnp.where(
            lax.broadcasted_iota(jnp.int32, (Mi, wcin), 0) % h != h - 1, 1.0, 0.0)
        x_dn = (jnp.concatenate([x2d.astype(f32)[1:], jnp.zeros((1, wcin), f32)],
                                axis=0) * keep_last).astype(cdtype)

        ye = jnp.dot(x2d, wdec_ref[0], preferred_element_type=f32)      # even rows
        yo = (jnp.dot(x2d, wdec_ref[1], preferred_element_type=f32)     # odd rows
              + jnp.dot(x_dn, wdec_ref[2], preferred_element_type=f32))
        ye = jnp.where(ye > 0, ye, neg * ye)                            # LeakyReLU(0.1)
        yo = jnp.where(yo > 0, yo, neg * yo)

        # interleave even/odd rows -> deconv activation (Mo, W*Cout), image-major
        dec_f = jnp.concatenate([ye.reshape(Mi, 1, wcout), yo.reshape(Mi, 1, wcout)],
                                axis=1).reshape(Mo, wcout)

        # ---- skip fusion: 3 vertical taps x {deconv, skip} = 6 banded matmuls ----
        skp = skip_ref[...]                                             # cdtype
        skp_f = skp.astype(f32)

        row_c = lax.broadcasted_iota(jnp.int32, (Mo, wcout), 0) % H
        row_s = lax.broadcasted_iota(jnp.int32, (Mo, wskip), 0) % H
        keep_top_c = jnp.where(row_c != 0, 1.0, 0.0)      # zero image-top rows (shift-down)
        keep_bot_c = jnp.where(row_c != H - 1, 1.0, 0.0)  # zero image-bottom rows (shift-up)
        keep_top_s = jnp.where(row_s != 0, 1.0, 0.0)
        keep_bot_s = jnp.where(row_s != H - 1, 1.0, 0.0)

        zc = jnp.zeros((1, wcout), f32)
        zs = jnp.zeros((1, wskip), f32)
        dec    = dec_f.astype(cdtype)
        dec_dn = (jnp.concatenate([zc, dec_f[:-1]], axis=0) * keep_top_c).astype(cdtype)
        dec_up = (jnp.concatenate([dec_f[1:], zc], axis=0) * keep_bot_c).astype(cdtype)
        skp_dn = (jnp.concatenate([zs, skp_f[:-1]], axis=0) * keep_top_s).astype(cdtype)
        skp_up = (jnp.concatenate([skp_f[1:], zs], axis=0) * keep_bot_s).astype(cdtype)

        acc = jnp.dot(dec,    wcd_ref[1], preferred_element_type=f32)
        acc = acc + jnp.dot(dec_dn, wcd_ref[0], preferred_element_type=f32)
        acc = acc + jnp.dot(dec_up, wcd_ref[2], preferred_element_type=f32)
        acc = acc + jnp.dot(skp,    wcs_ref[1], preferred_element_type=f32)
        acc = acc + jnp.dot(skp_dn, wcs_ref[0], preferred_element_type=f32)
        acc = acc + jnp.dot(skp_up, wcs_ref[2], preferred_element_type=f32)
        acc = jnp.where(acc > 0, acc, neg * acc)                        # LeakyReLU(0.1)
        o_ref[...] = acc.astype(o_ref.dtype)                            # lane-dense store

    return kernel


# ----------------------------------------------------------------------------
# Wrappers
# ----------------------------------------------------------------------------
def _pick_block_batch(N, h):
    """Images per grid step: fill MXU rows (target >=128), keep >=2 grid steps
    when possible (v7x has 2 TensorCores), keep row blocks a multiple of 8."""
    target = max(1, pl.cdiv(128, max(h, 1)))
    best = N
    for b in range(min(target, N), 0, -1):
        if N % b == 0 and ((b * h) % 8 == 0 or b == N):
            best = b
            break
    if best == N and N > 1:
        for b in range(N // 2, 0, -1):
            if N % b == 0 and (b * h) % 8 == 0:
                return b
    return best


def decoder_block_forward_flat(x_flat, skip_flat, weights, *, block_batch=None):
    """Hot path.  x_flat: (N, h, w*Cin); skip_flat: (N, 2h, 2w*Cskip) — NHWC
    lane-flattened.  `weights` from prep_decoder_weights() (hoisted).  Returns
    (N, 2h, 2w*Cout) float32."""
    wdec, wcd, wcs = weights
    N, h, wcin = x_flat.shape
    _, H, wskip = skip_flat.shape
    wcout = wcd.shape[-1]
    assert H == 2 * h
    cdtype = wdec.dtype

    B = _pick_block_batch(N, h) if block_batch is None else block_batch
    assert N % B == 0

    # image-major row stacking (contiguous reshape; compute dtype on the HBM side)
    x_rows = x_flat.astype(cdtype).reshape(N * h, wcin)
    s_rows = skip_flat.astype(cdtype).reshape(N * H, wskip)

    # Explicit scoped-VMEM budget: 2x (pipeline) buffers for every operand block.
    nbytes = lambda a: a.size * a.dtype.itemsize
    est = 2 * (nbytes(wdec) + nbytes(wcd) + nbytes(wcs)
               + B * h * wcin * x_rows.dtype.itemsize
               + B * H * wskip * s_rows.dtype.itemsize
               + B * H * wcout * 4)
    vmem_limit = int(min(max(4 * est + (8 << 20), 32 << 20), 48 << 20))

    out_rows = pl.pallas_call(
        _make_kernel(h, H, cdtype),
        out_shape=jax.ShapeDtypeStruct((N * H, wcout), jnp.float32),
        grid=(N // B,),
        in_specs=[
            pl.BlockSpec((B * h, wcin), lambda n: (n, 0)),
            pl.BlockSpec((B * H, wskip), lambda n: (n, 0)),
            pl.BlockSpec(wdec.shape, lambda n: (0, 0, 0)),   # constant -> no re-DMA
            pl.BlockSpec(wcd.shape, lambda n: (0, 0, 0)),
            pl.BlockSpec(wcs.shape, lambda n: (0, 0, 0)),
        ],
        out_specs=pl.BlockSpec((B * H, wcout), lambda n: (n, 0)),
        compiler_params=pltpu.CompilerParams(
            dimension_semantics=("parallel",),
            vmem_limit_bytes=vmem_limit),
    )(x_rows, s_rows, wdec, wcd, wcs)
    return out_rows.reshape(N, H, wcout)


@functools.partial(jax.jit, static_argnames=("block_batch",))
def decoder_block_forward(x_nchw, skip_nchw, weights, block_batch=None):
    """PyTorch NCHW module boundary (layout plumbing only; jitted end-to-end so
    the transposes fuse).  Production callers should use
    decoder_block_forward_flat with pre-flattened NHWC activations."""
    wdec, wcd, wcs = weights
    N, cin, h, w = x_nchw.shape
    _, cskip, H, W = skip_nchw.shape
    wcout = wcd.shape[-1]
    cout = wcout // W
    x_flat = jnp.transpose(x_nchw, (0, 2, 3, 1)).reshape(N, h, w * cin)
    skip_flat = jnp.transpose(skip_nchw, (0, 2, 3, 1)).reshape(N, H, W * cskip)
    out_flat = decoder_block_forward_flat(x_flat, skip_flat, weights,
                                          block_batch=block_batch)
    out = out_flat.reshape(N, H, W, cout)
    return jnp.transpose(out, (0, 3, 1, 2))


# ----------------------------------------------------------------------------
# Pure-JAX reference (lax convs) for a sanity check
# ----------------------------------------------------------------------------
def _leaky(v):
    return jnp.where(v > 0, v, 0.1 * v)


def decoder_block_reference(x_nchw, skip_nchw, w_deconv, w_conv):
    x = jnp.transpose(x_nchw, (0, 2, 3, 1))
    skip = jnp.transpose(skip_nchw, (0, 2, 3, 1))
    w_dec_hwio = jnp.transpose(w_deconv[:, :, ::-1, ::-1], (2, 3, 0, 1))
    dn = lax.conv_dimension_numbers(x.shape, w_dec_hwio.shape, ('NHWC', 'HWIO', 'NHWC'))
    deconv = lax.conv_general_dilated(
        x, w_dec_hwio, window_strides=(1, 1), padding=[(1, 2), (1, 2)],
        lhs_dilation=(2, 2), dimension_numbers=dn)
    deconv = _leaky(deconv)
    concat = jnp.concatenate([deconv, skip], axis=-1)
    w_conv_hwio = jnp.transpose(w_conv, (2, 3, 1, 0))
    dn2 = lax.conv_dimension_numbers(concat.shape, w_conv_hwio.shape, ('NHWC', 'HWIO', 'NHWC'))
    out = lax.conv_general_dilated(
        concat, w_conv_hwio, window_strides=(1, 1), padding=[(1, 1), (1, 1)],
        dimension_numbers=dn2)
    out = _leaky(out)
    return jnp.transpose(out, (0, 3, 1, 2))


# ----------------------------------------------------------------------------
if __name__ == "__main__":
    # DecoderBlock(in_channels=8, skip_channels=4, out_channels=8)
    # x: N x Cin x h x w ; skip: N x Cskip x 2h x 2w ; output: N x Cout x 2h x 2w
    # h=w=8 -> output 16x16, lane-dense output width W*Cout = 128.
    N, Cin, Cskip, Cout = 8, 8, 4, 8
    h, w = 8, 8

    key = jax.random.PRNGKey(0)
    k_x, k_s, k_d, k_c = jax.random.split(key, 4)

    x = jax.random.normal(k_x, (N, Cin, h, w), jnp.float32)
    skip = jax.random.normal(k_s, (N, Cskip, 2 * h, 2 * w), jnp.float32)

    # torch layouts: ConvTranspose2d (Cin, Cout, 3, 3); Conv2d (Cout, Cout+Cskip, 3, 3)
    # (both bias=False in the module, use_batch_norm=False)
    w_deconv = 0.1 * jax.random.normal(k_d, (Cin, Cout, 3, 3), jnp.float32)
    w_conv = 0.1 * jax.random.normal(k_c, (Cout, Cout + Cskip, 3, 3), jnp.float32)

    ref = decoder_block_reference(x, skip, w_deconv, w_conv)

    # f32 weights: exact parity with the reference
    weights_f32 = prep_decoder_weights(w_deconv, w_conv, w, dtype=jnp.float32)
    out_f32 = jax.block_until_ready(decoder_block_forward(x, skip, weights_f32))
    assert out_f32.shape == (N, Cout, 2 * h, 2 * w), out_f32.shape
    err_f32 = float(jnp.max(jnp.abs(out_f32 - ref)))
    assert jnp.allclose(out_f32, ref, rtol=2e-3, atol=2e-3), err_f32

    # bf16 weights/activations with f32 MXU accumulation (default perf config)
    weights_bf16 = prep_decoder_weights(w_deconv, w_conv, w, dtype=jnp.bfloat16)
    out_bf16 = jax.block_until_ready(decoder_block_forward(x, skip, weights_bf16))
    err_bf16 = float(jnp.max(jnp.abs(out_bf16 - ref)))
    assert jnp.allclose(out_bf16, ref, rtol=3e-2, atol=3e-2), err_bf16

    print("KERNEL_OK")
</pallas_src>

<mosaic_0001>
module attributes {stable_mosaic.version = 11 : i64} {
  func.func @kernel(%arg0: i32, %arg1: memref<32x64xf32, #tpu.memory_space<vmem>>, %arg2: memref<64x64xf32, #tpu.memory_space<vmem>>, %arg3: memref<3x64x128xf32, #tpu.memory_space<vmem>>, %arg4: memref<3x128x128xf32, #tpu.memory_space<vmem>>, %arg5: memref<3x64x128xf32, #tpu.memory_space<vmem>>, %arg6: memref<64x128xf32, #tpu.memory_space<vmem>>) attributes {dimension_semantics = [#tpu.dimension_semantics<parallel>], iteration_bounds = array<i64: 2>, scalar_prefetch = 0 : i64, scratch_operands = 0 : i64, tpu.core_type = #tpu.core_type<tc>, window_params = [{transform_indices = @transform_0, window_bounds = array<i64: 32, 64>}, {transform_indices = @transform_1, window_bounds = array<i64: 64, 64>}, {pipeline_mode = #tpu.pipeline_mode<synchronous>, transform_indices = @transform_2, window_bounds = array<i64: 3, 64, 128>}, {pipeline_mode = #tpu.pipeline_mode<synchronous>, transform_indices = @transform_3, window_bounds = array<i64: 3, 128, 128>}, {pipeline_mode = #tpu.pipeline_mode<synchronous>, transform_indices = @transform_4, window_bounds = array<i64: 3, 64, 128>}, {transform_indices = @transform_5, window_bounds = array<i64: 64, 128>}]} {
    %c0 = arith.constant 0 : index
    %c0_0 = arith.constant 0 : index
    %0 = vector.load %arg1[%c0, %c0_0] : memref<32x64xf32, #tpu.memory_space<vmem>>, vector<32x64xf32>
    %1 = tpu.iota {dimensions = array<i32: 0>} : vector<32x64xi32>
    %c8_i32 = arith.constant 8 : i32
    %c0_i32 = arith.constant 0 : i32
    %2 = arith.cmpi eq, %c8_i32, %c0_i32 : i32
    %c1_i32 = arith.constant 1 : i32
    %3 = arith.select %2, %c1_i32, %c8_i32 : i32
    %4 = vector.broadcast %3 : i32 to vector<32x64xi32>
    %5 = arith.remsi %1, %4 : vector<32x64xi32>
    %c0_i32_1 = arith.constant 0 : i32
    %6 = vector.broadcast %c0_i32_1 : i32 to vector<32x64xi32>
    %7 = arith.cmpi ne, %5, %6 : vector<32x64xi32>
    %c0_i32_2 = arith.constant 0 : i32
    %8 = vector.broadcast %c0_i32_2 : i32 to vector<32x64xi32>
    %9 = arith.cmpi slt, %5, %8 : vector<32x64xi32>
    %c0_i32_3 = arith.constant 0 : i32
    %10 = arith.cmpi slt, %3, %c0_i32_3 : i32
    %11 = vector.broadcast %10 : i1 to vector<32x64xi1>
    %12 = vector.broadcast %11 : vector<32x64xi1> to vector<32x64xi1>
    %13 = arith.xori %9, %12 : vector<32x64xi1>
    %14 = arith.andi %13, %7 : vector<32x64xi1>
    %15 = vector.broadcast %3 : i32 to vector<32x64xi32>
    %16 = arith.addi %5, %15 : vector<32x64xi32>
    %17 = arith.select %14, %16, %5 : vector<32x64xi1>, vector<32x64xi32>
    %c7_i32 = arith.constant 7 : i32
    %18 = vector.broadcast %c7_i32 : i32 to vector<32x64xi32>
    %19 = arith.cmpi ne, %17, %18 : vector<32x64xi32>
    %cst = arith.constant 1.000000e+00 : f32
    %cst_4 = arith.constant 0.000000e+00 : f32
    %20 = vector.broadcast %cst : f32 to vector<32x64xf32>
    %21 = vector.broadcast %cst_4 : f32 to vector<32x64xf32>
    %22 = arith.select %19, %20, %21 : vector<32x64xi1>, vector<32x64xf32>
    %23 = vector.extract_strided_slice %0 {offsets = [1, 0], sizes = [31, 64], strides = [1, 1]} : vector<32x64xf32> to vector<31x64xf32>
    %cst_5 = arith.constant 0.000000e+00 : f32
    %24 = vector.broadcast %cst_5 : f32 to vector<1x64xf32>
    %25 = tpu.concatenate %23, %24 in 0 : vector<31x64xf32>, vector<1x64xf32> -> vector<32x64xf32>
    %26 = arith.mulf %25, %22 : vector<32x64xf32>
    %c0_6 = arith.constant 0 : index
    %c0_7 = arith.constant 0 : index
    %c0_8 = arith.constant 0 : index
    %27 = vector.load %arg3[%c0_6, %c0_7, %c0_8] : memref<3x64x128xf32, #tpu.memory_space<vmem>>, vector<1x64x128xf32>
    %28 = vector.shape_cast %27 : vector<1x64x128xf32> to vector<64x128xf32>
    %cst_9 = arith.constant dense<0.000000e+00> : vector<32x128xf32>
    %29 = tpu.matmul %0, %28, %cst_9 {dimension_numbers = #tpu.dot_dimension_numbers<[1], [0], [0], [1], [0, 0, 1, 1], [], []>} : vector<32x64xf32>, vector<64x128xf32>, vector<32x128xf32> -> vector<32x128xf32>
    %c1 = arith.constant 1 : index
    %c0_10 = arith.constant 0 : index
    %c0_11 = arith.constant 0 : index
    %30 = vector.load %arg3[%c1, %c0_10, %c0_11] : memref<3x64x128xf32, #tpu.memory_space<vmem>>, vector<1x64x128xf32>
    %31 = vector.shape_cast %30 : vector<1x64x128xf32> to vector<64x128xf32>
    %cst_12 = arith.constant dense<0.000000e+00> : vector<32x128xf32>
    %32 = tpu.matmul %0, %31, %cst_12 {dimension_numbers = #tpu.dot_dimension_numbers<[1], [0], [0], [1], [0, 0, 1, 1], [], []>} : vector<32x64xf32>, vector<64x128xf32>, vector<32x128xf32> -> vector<32x128xf32>
    %c2 = arith.constant 2 : index
    %c0_13 = arith.constant 0 : index
    %c0_14 = arith.constant 0 : index
    %33 = vector.load %arg3[%c2, %c0_13, %c0_14] : memref<3x64x128xf32, #tpu.memory_space<vmem>>, vector<1x64x128xf32>
    %34 = vector.shape_cast %33 : vector<1x64x128xf32> to vector<64x128xf32>
    %cst_15 = arith.constant dense<0.000000e+00> : vector<32x128xf32>
    %35 = tpu.matmul %26, %34, %cst_15 {dimension_numbers = #tpu.dot_dimension_numbers<[1], [0], [0], [1], [0, 0, 1, 1], [], []>} : vector<32x64xf32>, vector<64x128xf32>, vector<32x128xf32> -> vector<32x128xf32>
    %36 = arith.addf %32, %35 : vector<32x128xf32>
    %cst_16 = arith.constant 0.000000e+00 : f32
    %37 = vector.broadcast %cst_16 : f32 to vector<32x128xf32>
    %38 = arith.cmpf ogt, %29, %37 : vector<32x128xf32>
    %cst_17 = arith.constant 1.000000e-01 : f32
    %39 = vector.broadcast %cst_17 : f32 to vector<32x128xf32>
    %40 = arith.mulf %39, %29 : vector<32x128xf32>
    %41 = arith.select %38, %29, %40 : vector<32x128xi1>, vector<32x128xf32>
    %cst_18 = arith.constant 0.000000e+00 : f32
    %42 = vector.broadcast %cst_18 : f32 to vector<32x128xf32>
    %43 = arith.cmpf ogt, %36, %42 : vector<32x128xf32>
    %cst_19 = arith.constant 1.000000e-01 : f32
    %44 = vector.broadcast %cst_19 : f32 to vector<32x128xf32>
    %45 = arith.mulf %44, %36 : vector<32x128xf32>
    %46 = arith.select %43, %36, %45 : vector<32x128xi1>, vector<32x128xf32>
    %47 = vector.shape_cast %41 : vector<32x128xf32> to vector<32x1x128xf32>
    %48 = vector.shape_cast %46 : vector<32x128xf32> to vector<32x1x128xf32>
    %49 = tpu.concatenate %47, %48 in 1 : vector<32x1x128xf32>, vector<32x1x128xf32> -> vector<32x2x128xf32>
    %50 = vector.shape_cast %49 : vector<32x2x128xf32> to vector<64x128xf32>
    %c0_20 = arith.constant 0 : index
    %c0_21 = arith.constant 0 : index
    %51 = vector.load %arg2[%c0_20, %c0_21] : memref<64x64xf32, #tpu.memory_space<vmem>>, vector<64x64xf32>
    %52 = tpu.iota {dimensions = array<i32: 0>} : vector<64x128xi32>
    %c16_i32 = arith.constant 16 : i32
    %c0_i32_22 = arith.constant 0 : i32
    %53 = arith.cmpi eq, %c16_i32, %c0_i32_22 : i32
    %c1_i32_23 = arith.constant 1 : i32
    %54 = arith.select %53, %c1_i32_23, %c16_i32 : i32
    %55 = vector.broadcast %54 : i32 to vector<64x128xi32>
    %56 = arith.remsi %52, %55 : vector<64x128xi32>
    %c0_i32_24 = arith.constant 0 : i32
    %57 = vector.broadcast %c0_i32_24 : i32 to vector<64x128xi32>
    %58 = arith.cmpi ne, %56, %57 : vector<64x128xi32>
    %c0_i32_25 = arith.constant 0 : i32
    %59 = vector.broadcast %c0_i32_25 : i32 to vector<64x128xi32>
    %60 = arith.cmpi slt, %56, %59 : vector<64x128xi32>
    %c0_i32_26 = arith.constant 0 : i32
    %61 = arith.cmpi slt, %54, %c0_i32_26 : i32
    %62 = vector.broadcast %61 : i1 to vector<64x128xi1>
    %63 = vector.broadcast %62 : vector<64x128xi1> to vector<64x128xi1>
    %64 = arith.xori %60, %63 : vector<64x128xi1>
    %65 = arith.andi %64, %58 : vector<64x128xi1>
    %66 = vector.broadcast %54 : i32 to vector<64x128xi32>
    %67 = arith.addi %56, %66 : vector<64x128xi32>
    %68 = arith.select %65, %67, %56 : vector<64x128xi1>, vector<64x128xi32>
    %69 = tpu.iota {dimensions = array<i32: 0>} : vector<64x64xi32>
    %c16_i32_27 = arith.constant 16 : i32
    %c0_i32_28 = arith.constant 0 : i32
    %70 = arith.cmpi eq, %c16_i32_27, %c0_i32_28 : i32
    %c1_i32_29 = arith.constant 1 : i32
    %71 = arith.select %70, %c1_i32_29, %c16_i32_27 : i32
    %72 = vector.broadcast %71 : i32 to vector<64x64xi32>
    %73 = arith.remsi %69, %72 : vector<64x64xi32>
    %c0_i32_30 = arith.constant 0 : i32
    %74 = vector.broadcast %c0_i32_30 : i32 to vector<64x64xi32>
    %75 = arith.cmpi ne, %73, %74 : vector<64x64xi32>
    %c0_i32_31 = arith.constant 0 : i32
    %76 = vector.broadcast %c0_i32_31 : i32 to vector<64x64xi32>
    %77 = arith.cmpi slt, %73, %76 : vector<64x64xi32>
    %c0_i32_32 = arith.constant 0 : i32
    %78 = arith.cmpi slt, %71, %c0_i32_32 : i32
    %79 = vector.broadcast %78 : i1 to vector<64x64xi1>
    %80 = vector.broadcast %79 : vector<64x64xi1> to vector<64x64xi1>
    %81 = arith.xori %77, %80 : vector<64x64xi1>
    %82 = arith.andi %81, %75 : vector<64x64xi1>
    %83 = vector.broadcast %71 : i32 to vector<64x64xi32>
    %84 = arith.addi %73, %83 : vector<64x64xi32>
    %85 = arith.select %82, %84, %73 : vector<64x64xi1>, vector<64x64xi32>
    %c0_i32_33 = arith.constant 0 : i32
    %86 = vector.broadcast %c0_i32_33 : i32 to vector<64x128xi32>
    %87 = arith.cmpi ne, %68, %86 : vector<64x128xi32>
    %cst_34 = arith.constant 1.000000e+00 : f32
    %cst_35 = arith.constant 0.000000e+00 : f32
    %88 = vector.broadcast %cst_34 : f32 to vector<64x128xf32>
    %89 = vector.broadcast %cst_35 : f32 to vector<64x128xf32>
    %90 = arith.select %87, %88, %89 : vector<64x128xi1>, vector<64x128xf32>
    %c15_i32 = arith.constant 15 : i32
    %91 = vector.broadcast %c15_i32 : i32 to vector<64x128xi32>
    %92 = arith.cmpi ne, %68, %91 : vector<64x128xi32>
    %cst_36 = arith.constant 1.000000e+00 : f32
    %cst_37 = arith.constant 0.000000e+00 : f32
    %93 = vector.broadcast %cst_36 : f32 to vector<64x128xf32>
    %94 = vector.broadcast %cst_37 : f32 to vector<64x128xf32>
    %95 = arith.select %92, %93, %94 : vector<64x128xi1>, vector<64x128xf32>
    %c0_i32_38 = arith.constant 0 : i32
    %96 = vector.broadcast %c0_i32_38 : i32 to vector<64x64xi32>
    %97 = arith.cmpi ne, %85, %96 : vector<64x64xi32>
    %cst_39 = arith.constant 1.000000e+00 : f32
    %cst_40 = arith.constant 0.000000e+00 : f32
    %98 = vector.broadcast %cst_39 : f32 to vector<64x64xf32>
    %99 = vector.broadcast %cst_40 : f32 to vector<64x64xf32>
    %100 = arith.select %97, %98, %99 : vector<64x64xi1>, vector<64x64xf32>
    %c15_i32_41 = arith.constant 15 : i32
    %101 = vector.broadcast %c15_i32_41 : i32 to vector<64x64xi32>
    %102 = arith.cmpi ne, %85, %101 : vector<64x64xi32>
    %cst_42 = arith.constant 1.000000e+00 : f32
    %cst_43 = arith.constant 0.000000e+00 : f32
    %103 = vector.broadcast %cst_42 : f32 to vector<64x64xf32>
    %104 = vector.broadcast %cst_43 : f32 to vector<64x64xf32>
    %105 = arith.select %102, %103, %104 : vector<64x64xi1>, vector<64x64xf32>
    %cst_44 = arith.constant 0.000000e+00 : f32
    %106 = vector.broadcast %cst_44 : f32 to vector<1x128xf32>
    %cst_45 = arith.constant 0.000000e+00 : f32
    %107 = vector.broadcast %cst_45 : f32 to vector<1x64xf32>
    %108 = vector.extract_strided_slice %50 {offsets = [0, 0], sizes = [63, 128], strides = [1, 1]} : vector<64x128xf32> to vector<63x128xf32>
    %109 = tpu.concatenate %106, %108 in 0 : vector<1x128xf32>, vector<63x128xf32> -> vector<64x128xf32>
    %110 = arith.mulf %109, %90 : vector<64x128xf32>
    %111 = vector.extract_strided_slice %50 {offsets = [1, 0], sizes = [63, 128], strides = [1, 1]} : vector<64x128xf32> to vector<63x128xf32>
    %112 = tpu.concatenate %111, %106 in 0 : vector<63x128xf32>, vector<1x128xf32> -> vector<64x128xf32>
    %113 = arith.mulf %112, %95 : vector<64x128xf32>
    %114 = vector.extract_strided_slice %51 {offsets = [0, 0], sizes = [63, 64], strides = [1, 1]} : vector<64x64xf32> to vector<63x64xf32>
    %115 = tpu.concatenate %107, %114 in 0 : vector<1x64xf32>, vector<63x64xf32> -> vector<64x64xf32>
    %116 = arith.mulf %115, %100 : vector<64x64xf32>
    %117 = vector.extract_strided_slice %51 {offsets = [1, 0], sizes = [63, 64], strides = [1, 1]} : vector<64x64xf32> to vector<63x64xf32>
    %118 = tpu.concatenate %117, %107 in 0 : vector<63x64xf32>, vector<1x64xf32> -> vector<64x64xf32>
    %119 = arith.mulf %118, %105 : vector<64x64xf32>
    %c1_46 = arith.constant 1 : index
    %c0_47 = arith.constant 0 : index
    %c0_48 = arith.constant 0 : index
    %120 = vector.load %arg4[%c1_46, %c0_47, %c0_48] : memref<3x128x128xf32, #tpu.memory_space<vmem>>, vector<1x128x128xf32>
    %121 = vector.shape_cast %120 : vector<1x128x128xf32> to vector<128x128xf32>
    %cst_49 = arith.constant dense<0.000000e+00> : vector<64x128xf32>
    %122 = tpu.matmul %50, %121, %cst_49 {dimension_numbers = #tpu.dot_dimension_numbers<[1], [0], [0], [1], [0, 0, 1, 1], [], []>} : vector<64x128xf32>, vector<128x128xf32>, vector<64x128xf32> -> vector<64x128xf32>
    %c0_50 = arith.constant 0 : index
    %c0_51 = arith.constant 0 : index
    %c0_52 = arith.constant 0 : index
    %123 = vector.load %arg4[%c0_50, %c0_51, %c0_52] : memref<3x128x128xf32, #tpu.memory_space<vmem>>, vector<1x128x128xf32>
    %124 = vector.shape_cast %123 : vector<1x128x128xf32> to vector<128x128xf32>
    %cst_53 = arith.constant dense<0.000000e+00> : vector<64x128xf32>
    %125 = tpu.matmul %110, %124, %cst_53 {dimension_numbers = #tpu.dot_dimension_numbers<[1], [0], [0], [1], [0, 0, 1, 1], [], []>} : vector<64x128xf32>, vector<128x128xf32>, vector<64x128xf32> -> vector<64x128xf32>
    %126 = arith.addf %122, %125 : vector<64x128xf32>
    %c2_54 = arith.constant 2 : index
    %c0_55 = arith.constant 0 : index
    %c0_56 = arith.constant 0 : index
    %127 = vector.load %arg4[%c2_54, %c0_55, %c0_56] : memref<3x128x128xf32, #tpu.memory_space<vmem>>, vector<1x128x128xf32>
    %128 = vector.shape_cast %127 : vector<1x128x128xf32> to vector<128x128xf32>
    %cst_57 = arith.constant dense<0.000000e+00> : vector<64x128xf32>
    %129 = tpu.matmul %113, %128, %cst_57 {dimension_numbers = #tpu.dot_dimension_numbers<[1], [0], [0], [1], [0, 0, 1, 1], [], []>} : vector<64x128xf32>, vector<128x128xf32>, vector<64x128xf32> -> vector<64x128xf32>
    %130 = arith.addf %126, %129 : vector<64x128xf32>
    %c1_58 = arith.constant 1 : index
    %c0_59 = arith.constant 0 : index
    %c0_60 = arith.constant 0 : index
    %131 = vector.load %arg5[%c1_58, %c0_59, %c0_60] : memref<3x64x128xf32, #tpu.memory_space<vmem>>, vector<1x64x128xf32>
    %132 = vector.shape_cast %131 : vector<1x64x128xf32> to vector<64x128xf32>
    %cst_61 = arith.constant dense<0.000000e+00> : vector<64x128xf32>
    %133 = tpu.matmul %51, %132, %cst_61 {dimension_numbers = #tpu.dot_dimension_numbers<[1], [0], [0], [1], [0, 0, 1, 1], [], []>} : vector<64x64xf32>, vector<64x128xf32>, vector<64x128xf32> -> vector<64x128xf32>
    %134 = arith.addf %130, %133 : vector<64x128xf32>
    %c0_62 = arith.constant 0 : index
    %c0_63 = arith.constant 0 : index
    %c0_64 = arith.constant 0 : index
    %135 = vector.load %arg5[%c0_62, %c0_63, %c0_64] : memref<3x64x128xf32, #tpu.memory_space<vmem>>, vector<1x64x128xf32>
    %136 = vector.shape_cast %135 : vector<1x64x128xf32> to vector<64x128xf32>
    %cst_65 = arith.constant dense<0.000000e+00> : vector<64x128xf32>
    %137 = tpu.matmul %116, %136, %cst_65 {dimension_numbers = #tpu.dot_dimension_numbers<[1], [0], [0], [1], [0, 0, 1, 1], [], []>} : vector<64x64xf32>, vector<64x128xf32>, vector<64x128xf32> -> vector<64x128xf32>
    %138 = arith.addf %134, %137 : vector<64x128xf32>
    %c2_66 = arith.constant 2 : index
    %c0_67 = arith.constant 0 : index
    %c0_68 = arith.constant 0 : index
    %139 = vector.load %arg5[%c2_66, %c0_67, %c0_68] : memref<3x64x128xf32, #tpu.memory_space<vmem>>, vector<1x64x128xf32>
    %140 = vector.shape_cast %139 : vector<1x64x128xf32> to vector<64x128xf32>
    %cst_69 = arith.constant dense<0.000000e+00> : vector<64x128xf32>
    %141 = tpu.matmul %119, %140, %cst_69 {dimension_numbers = #tpu.dot_dimension_numbers<[1], [0], [0], [1], [0, 0, 1, 1], [], []>} : vector<64x64xf32>, vector<64x128xf32>, vector<64x128xf32> -> vector<64x128xf32>
    %142 = arith.addf %138, %141 : vector<64x128xf32>
    %cst_70 = arith.constant 0.000000e+00 : f32
    %143 = vector.broadcast %cst_70 : f32 to vector<64x128xf32>
    %144 = arith.cmpf ogt, %142, %143 : vector<64x128xf32>
    %cst_71 = arith.constant 1.000000e-01 : f32
    %145 = vector.broadcast %cst_71 : f32 to vector<64x128xf32>
    %146 = arith.mulf %145, %142 : vector<64x128xf32>
    %147 = arith.select %144, %142, %146 : vector<64x128xi1>, vector<64x128xf32>
    %c0_72 = arith.constant 0 : index
    %c0_73 = arith.constant 0 : index
    %148 = vector.load %arg6[%c0_72, %c0_73] : memref<64x128xf32, #tpu.memory_space<vmem>>, vector<64x128xf32>
    tpu.vector_store %arg6[%c0_72, %c0_73], %147 {strides = array<i32>} : memref<64x128xf32, #tpu.memory_space<vmem>>, vector<64x128xf32>,
    return
  }
  func.func @transform_0(%arg0: i32) -> (i32, i32) {
    %c0_i32 = arith.constant 0 : i32
    %c0_i32_0 = arith.constant 0 : i32
    return %arg0, %c0_i32 : i32, i32
  }
  func.func @transform_1(%arg0: i32) -> (i32, i32) {
    %c0_i32 = arith.constant 0 : i32
    %c0_i32_0 = arith.constant 0 : i32
    return %arg0, %c0_i32 : i32, i32
  }
  func.func @transform_2(%arg0: i32) -> (i32, i32, i32) {
    %c0_i32 = arith.constant 0 : i32
    %c0_i32_0 = arith.constant 0 : i32
    %c0_i32_1 = arith.constant 0 : i32
    %c0_i32_2 = arith.constant 0 : i32
    return %c0_i32, %c0_i32_0, %c0_i32_1 : i32, i32, i32
  }
  func.func @transform_3(%arg0: i32) -> (i32, i32, i32) {
    %c0_i32 = arith.constant 0 : i32
    %c0_i32_0 = arith.constant 0 : i32
    %c0_i32_1 = arith.constant 0 : i32
    %c0_i32_2 = arith.constant 0 : i32
    return %c0_i32, %c0_i32_0, %c0_i32_1 : i32, i32, i32
  }
  func.func @transform_4(%arg0: i32) -> (i32, i32, i32) {
    %c0_i32 = arith.constant 0 : i32
    %c0_i32_0 = arith.constant 0 : i32
    %c0_i32_1 = arith.constant 0 : i32
    %c0_i32_2 = arith.constant 0 : i32
    return %c0_i32, %c0_i32_0, %c0_i32_1 : i32, i32, i32
  }
  func.func @transform_5(%arg0: i32) -> (i32, i32) {
    %c0_i32 = arith.constant 0 : i32
    %c0_i32_0 = arith.constant 0 : i32
    return %arg0, %c0_i32 : i32, i32
  }
}

</mosaic_0001>

<llo_original>
// kernel: decoder_block_forward.1
$region0: #{decoder_block_forward.1}
  #allocation0 [shape = 'u32[]', space=smem, size = 0x4, offset = 0x4, fixed_abs, tag = 'smem constant byte address 0x4 - core index']
  #allocation1 [shape = 'u32[144,128]{1,0:T(1,128)}', space=vmem, size = 0x12000, scoped, tag = 'internal scratch']
  %s0 = inlined_call_operand.vmem [shape: f32[64,64], index: 0, kind: input, shape index: {}]
  %s1 = inlined_call_operand.vmem [shape: f32[128,64], index: 1, kind: input, shape index: {}]
  %s2 = inlined_call_operand.vmem [shape: f32[3,64,128], index: 2, kind: input, shape index: {}]
  %s3 = inlined_call_operand.vmem [shape: f32[3,128,128], index: 3, kind: input, shape index: {}]
  %s4 = inlined_call_operand.vmem [shape: f32[3,64,128], index: 4, kind: input, shape index: {}]
  %s5 = inlined_call_operand.vmem [shape: f32[128,128], index: 5, kind: output, shape index: {}]
  %s6 = sld [smem:[#allocation0]]
  $region53: #{decoder_block_forward.1} parent=0
    _
  %s8 = ssub.s32 1, %s6
  %s9 = scalar_select 0, %s8, %s6
  loop: start=0, step=1, limit=4
  $region2: #{decoder_block_forward.1} parent=0 // loop_pre_header
    _
  $region3: #{decoder_block_forward.1} parent=0 // loop_header
    %s11 = sphi 0, %s15
    %p12 = scmp.ge.s32.totalorder %s11, 4
    %s21 = sphi 0, %s23
    %s24 = sphi 0, %s21
    %s25 = sphi 0, %s24
    %s41 = sphi 0, %s25
    %s47 = sphi 0, %s49
    %s50 = sphi 0, %s47
    %s51 = sphi 0, %s50
    %s67 = sphi 0, %s51
    %s71 = sphi 0, %s71
    %s73 = sphi 0, %s71
    %s74 = sphi 0, %s73
    %s88 = sphi 0, %s74
    %s92 = sphi 0, %s92
    %s94 = sphi 0, %s92
    %s95 = sphi 0, %s94
    %s109 = sphi 0, %s95
    %s113 = sphi 0, %s113
    %s115 = sphi 0, %s113
    %s116 = sphi 0, %s115
    %s130 = sphi 0, %s116
    %s136 = sphi 0, %s138
    %s139 = sphi 0, %s136
    %s140 = sphi 0, %s139
    %s156 = sphi 0, %s140
  $region4: #{decoder_block_forward.1} parent=0 // loop_header_branch
    %14 = sbr.rel (%p12) target = $region8
  $region5: #{decoder_block_forward.1} parent=0 // loop_body
    %s16 = ssub.s32 %s11, 1
    %s17 = ssub.s32 %s11, 2
    %s18 = sadd.s32 %s11, 1
    %s19 = ssub.s32 %s11, %s18
    %p20 = scmp.eq.s32.totalorder %s19, 0
    %s22 = sadd.s32 %s21, 1
    %s23 = scalar_select %p20, %s21, %s22
    %p26 = pneg %p20
    %p27 = scmp.eq.s32.totalorder %s11, 1
    %p28 = por %p26, %p27
    %p29 = scmp.ne.s32.totalorder %s21, %s24
    %p30 = scmp.eq.s32.totalorder %s11, 0
    %p31 = por %p29, %p30
    %p32 = scmp.ne.s32.totalorder %s21, %s24
    %p33 = scmp.eq.s32.totalorder %s16, 1
    %p34 = por %p32, %p33
    %p35 = scmp.ne.s32.totalorder %s24, %s25
    %p36 = scmp.eq.s32.totalorder %s16, 0
    %p37 = por %p35, %p36
    %p38 = scmp.ne.s32.totalorder %s24, %s25
    %p39 = scmp.eq.s32.totalorder %s17, 1
    %p40 = por %p38, %p39
    %p42 = scmp.ne.s32.totalorder %s25, %s41
    %p43 = scmp.eq.s32.totalorder %s17, 0
    %p44 = por %p42, %p43
    %s45 = ssub.s32 %s11, %s18
    %p46 = scmp.eq.s32.totalorder %s45, 0
    %s48 = sadd.s32 %s47, 1
    %s49 = scalar_select %p46, %s47, %s48
    %p52 = pneg %p46
    %p53 = scmp.eq.s32.totalorder %s11, 1
    %p54 = por %p52, %p53
    %p55 = scmp.ne.s32.totalorder %s47, %s50
    %p56 = scmp.eq.s32.totalorder %s11, 0
    %p57 = por %p55, %p56
    %p58 = scmp.ne.s32.totalorder %s47, %s50
    %p59 = scmp.eq.s32.totalorder %s16, 1
    %p60 = por %p58, %p59
    %p61 = scmp.ne.s32.totalorder %s50, %s51
    %p62 = scmp.eq.s32.totalorder %s16, 0
    %p63 = por %p61, %p62
    %p64 = scmp.ne.s32.totalorder %s50, %s51
    %p65 = scmp.eq.s32.totalorder %s17, 1
    %p66 = por %p64, %p65
    %p68 = scmp.ne.s32.totalorder %s51, %s67
    %p69 = scmp.eq.s32.totalorder %s17, 0
    %p70 = por %p68, %p69
    %s72 = sadd.s32 %s71, 1
    %p75 = scmp.eq.s32.totalorder %s11, 1
    %p76 = scmp.ne.s32.totalorder %s71, %s73
    %p77 = scmp.eq.s32.totalorder %s11, 0
    %p78 = por %p76, %p77
    %p79 = scmp.ne.s32.totalorder %s71, %s73
    %p80 = scmp.eq.s32.totalorder %s16, 1
    %p81 = por %p79, %p80
    %p82 = scmp.ne.s32.totalorder %s73, %s74
    %p83 = scmp.eq.s32.totalorder %s16, 0
    %p84 = por %p82, %p83
    %p85 = scmp.ne.s32.totalorder %s73, %s74
    %p86 = scmp.eq.s32.totalorder %s17, 1
    %p87 = por %p85, %p86
    %p89 = scmp.ne.s32.totalorder %s74, %s88
    %p90 = scmp.eq.s32.totalorder %s17, 0
    %p91 = por %p89, %p90
    %s93 = sadd.s32 %s92, 1
    %p96 = scmp.eq.s32.totalorder %s11, 1
    %p97 = scmp.ne.s32.totalorder %s92, %s94
    %p98 = scmp.eq.s32.totalorder %s11, 0
    %p99 = por %p97, %p98
    %p100 = scmp.ne.s32.totalorder %s92, %s94
    %p101 = scmp.eq.s32.totalorder %s16, 1
    %p102 = por %p100, %p101
    %p103 = scmp.ne.s32.totalorder %s94, %s95
    %p104 = scmp.eq.s32.totalorder %s16, 0
    %p105 = por %p103, %p104
    %p106 = scmp.ne.s32.totalorder %s94, %s95
    %p107 = scmp.eq.s32.totalorder %s17, 1
    %p108 = por %p106, %p107
    %p110 = scmp.ne.s32.totalorder %s95, %s109
    %p111 = scmp.eq.s32.totalorder %s17, 0
    %p112 = por %p110, %p111
    %s114 = sadd.s32 %s113, 1
    %p117 = scmp.eq.s32.totalorder %s11, 1
    %p118 = scmp.ne.s32.totalorder %s113, %s115
    %p119 = scmp.eq.s32.totalorder %s11, 0
    %p120 = por %p118, %p119
    %p121 = scmp.ne.s32.totalorder %s113, %s115
    %p122 = scmp.eq.s32.totalorder %s16, 1
    %p123 = por %p121, %p122
    %p124 = scmp.ne.s32.totalorder %s115, %s116
    %p125 = scmp.eq.s32.totalorder %s16, 0
    %p126 = por %p124, %p125
    %p127 = scmp.ne.s32.totalorder %s115, %s116
    %p128 = scmp.eq.s32.totalorder %s17, 1
    %p129 = por %p127, %p128
    %p131 = scmp.ne.s32.totalorder %s116, %s130
    %p132 = scmp.eq.s32.totalorder %s17, 0
    %p133 = por %p131, %p132
    %s134 = ssub.s32 %s11, %s18
    %p135 = scmp.eq.s32.totalorder %s134, 0
    %s137 = sadd.s32 %s136, 1
    %s138 = scalar_select %p135, %s136, %s137
    %p141 = pneg %p135
    %p142 = scmp.eq.s32.totalorder %s11, 1
    %p143 = por %p141, %p142
    %p144 = scmp.ne.s32.totalorder %s136, %s139
    %p145 = scmp.eq.s32.totalorder %s11, 0
    %p146 = por %p144, %p145
    %p147 = scmp.ne.s32.totalorder %s136, %s139
    %p148 = scmp.eq.s32.totalorder %s16, 1
    %p149 = por %p147, %p148
    %p150 = scmp.ne.s32.totalorder %s139, %s140
    %p151 = scmp.eq.s32.totalorder %s16, 0
    %p152 = por %p150, %p151
    %p153 = scmp.ne.s32.totalorder %s139, %s140
    %p154 = scmp.eq.s32.totalorder %s17, 1
    %p155 = por %p153, %p154
    %p157 = scmp.ne.s32.totalorder %s140, %s156
    %p158 = scmp.eq.s32.totalorder %s17, 0
    %p159 = por %p157, %p158
    %p160 = scmp.le.s32.totalorder 1, %s11
    %p161 = scmp.lt.s32.totalorder %s11, 3
    %p162 = pnand %p160, %p161
    %p163 = pneg %p162
    // Predicated region
    $region9: #{decoder_block_forward.1} parent=5 // pred_check
      _
    $region10: #{decoder_block_forward.1} parent=5 // pred_check_branch
      %165 = sbr.rel (%p162) target = $region12
    $region11: #{decoder_block_forward.1} parent=5 // pred_region
      %s166 = ssub.s32 %s11, 1
      // Predicated region
      $region13: #{decoder_block_forward.1} parent=11 // pred_check
        %p167 = pneg %p84
      $region14: #{decoder_block_forward.1} parent=11 // pred_check_branch
        %169 = sbr.rel (%p167) target = $region16
      $region15: #{decoder_block_forward.1} parent=11 // pred_region
        _
      $region16: #{decoder_block_forward.1} parent=11 // pred_fallthru
        _
      // Predicated region
      $region17: #{decoder_block_forward.1} parent=11 // pred_check
        %p170 = pneg %p105
      $region18: #{decoder_block_forward.1} parent=11 // pred_check_branch
        %172 = sbr.rel (%p170) target = $region20
      $region19: #{decoder_block_forward.1} parent=11 // pred_region
        _
      $region20: #{decoder_block_forward.1} parent=11 // pred_fallthru
        _
      // Predicated region
      $region21: #{decoder_block_forward.1} parent=11 // pred_check
        %p173 = pneg %p126
      $region22: #{decoder_block_forward.1} parent=11 // pred_check_branch
        %175 = sbr.rel (%p173) target = $region24
      $region23: #{decoder_block_forward.1} parent=11 // pred_region
        _
      $region24: #{decoder_block_forward.1} parent=11 // pred_fallthru
        _
    $region12: #{decoder_block_forward.1} parent=5 // pred_fallthru
      _
    %p176 = scmp.lt.s32.totalorder %s11, 2
    // Predicated region
    $region25: #{decoder_block_forward.1} parent=5 // pred_check
      %p177 = pneg %p176
    $region26: #{decoder_block_forward.1} parent=5 // pred_check_branch
      %179 = sbr.rel (%p177) target = $region28
    $region27: #{decoder_block_forward.1} parent=5 // pred_region
      // Predicated region
      $region29: #{decoder_block_forward.1} parent=27 // pred_check
        %p180 = pneg %p31
      $region30: #{decoder_block_forward.1} parent=27 // pred_check_branch
        %182 = sbr.rel (%p180) target = $region32
      $region31: #{decoder_block_forward.1} parent=27 // pred_region
        %s183 = smul.u32 4, %s11
        %p184 = scmp.lt.s32.totalorder %s183, 7
        %s185 = scalar_select %p184, %s183, 7
        %s186 = smul.addr %s185, 8
        %s187 = scalar_lea.vmem %s0, %s186
        %s188 = smul.u32 4, %s11
      $region32: #{decoder_block_forward.1} parent=27 // pred_fallthru
        _
      // Predicated region
      $region33: #{decoder_block_forward.1} parent=27 // pred_check
        %p189 = pneg %p57
      $region34: #{decoder_block_forward.1} parent=27 // pred_check_branch
        %191 = sbr.rel (%p189) target = $region36
      $region35: #{decoder_block_forward.1} parent=27 // pred_region
        %s192 = smul.u32 8, %s11
        %p193 = scmp.lt.s32.totalorder %s192, 15
        %s194 = scalar_select %p193, %s192, 15
        %s195 = smul.addr %s194, 8
        %s196 = scalar_lea.vmem %s1, %s195
        %s197 = smul.u32 8, %s11
      $region36: #{decoder_block_forward.1} parent=27 // pred_fallthru
        _
    $region28: #{decoder_block_forward.1} parent=5 // pred_fallthru
      _
    %p198 = scmp.le.s32.totalorder 1, %s11
    %p199 = scmp.lt.s32.totalorder %s11, 3
    %p200 = pnand %p198, %p199
    %p201 = pneg %p200
    // Predicated region
    $region37: #{decoder_block_forward.1} parent=5 // pred_check
      _
    $region38: #{decoder_block_forward.1} parent=5 // pred_check_branch
      %203 = sbr.rel (%p200) target = $region40
    $region39: #{decoder_block_forward.1} parent=5 // pred_region
      %s204 = ssub.s32 %s11, 1
      %s205 = smul.u32 4, %s16
      %p206 = scmp.lt.s32.totalorder %s205, 7
      %s207 = scalar_select %p206, %s205, 7
      %s208 = smul.addr %s207, 8
      %s209 = scalar_lea.vmem %s0, %s208
      %p210 = pneg %p37
      %p211 = pneg %p34
      %s212 = smul.u32 8, %s16
      %p213 = scmp.lt.s32.totalorder %s212, 15
      %s214 = scalar_select %p213, %s212, 15
      %s215 = smul.addr %s214, 8
      %s216 = scalar_lea.vmem %s1, %s215
      %p217 = pneg %p63
      %p218 = pneg %p60
      %p219 = pneg %p84
      %p220 = pneg %p81
      %p221 = pneg %p105
      %p222 = pneg %p102
      %p223 = pneg %p126
      %p224 = pneg %p123
      %p225 = pneg %p152
      %p226 = pneg %p149
      %s227 = smul.u32 8, %s16
      %p228 = scmp.lt.s32.totalorder %s227, 15
      %s229 = scalar_select %p228, %s227, 15
      %s230 = smul.addr %s229, 8
      %s231 = scalar_lea.vmem %s5, %s230
      %s232 = smul.u32 4, %s16
      %p233 = scmp.lt.s32.totalorder %s232, 7
      %s234 = scalar_select %p233, %s232, 7
      %s235 = smul.addr %s234, 8
      %s236 = scalar_lea.vmem %s0, %s235
      %s237 = smul.u32 4, %s16
      %s238 = smul.u32 8, %s16
      %p239 = scmp.lt.s32.totalorder %s238, 15
      %s240 = scalar_select %p239, %s238, 15
      %s241 = smul.addr %s240, 8
      %s242 = scalar_lea.vmem %s1, %s241
      %s243 = smul.u32 8, %s16
      %s244 = smul.u32 8, %s16
      %p245 = scmp.lt.s32.totalorder %s244, 15
      %s246 = scalar_select %p245, %s244, 15
      %s247 = smul.addr %s246, 8
      %s248 = scalar_lea.vmem %s5, %s247
      %s249 = smul.u32 8, %s16
      %v250 = vld [vmem:[%s236] sm:$0xff]
      %v251 = vld [vmem:[%s236 + $0x8] sm:$0xff]
      %v252 = vld [vmem:[%s236 + $0x10] sm:$0xff]
      %v253 = vld [vmem:[%s236 + $0x18] sm:$0xff]
      %v254 = vlaneseq
      %v255 = vshrl.u32 %v254, 7
      %v256 = vadd.s32 %v255, 8
      %v257 = vadd.s32 %v255, 16
      %v258 = vadd.s32 %v255, 24
      %vm259 = vcmp.lt.s32.totalorder %v255, 0
      %v260 = vsub.s32 0, %v255
      %v261 = vsel %vm259, %v260, %v255
      %v262 = vshrl.u32 %v261, 3
      %v263 = vand.u32 %v261, 7
      %v264 = vsub.s32 0, %v263
      %v265 = vsel %vm259, %v264, %v263
      %vm266 = vcmp.lt.s32.totalorder %v256, 0
      %v267 = vsub.s32 0, %v256
      %v268 = vsel %vm266, %v267, %v256
      %v269 = vshrl.u32 %v268, 3
      %v270 = vand.u32 %v268, 7
      %v271 = vsub.s32 0, %v270
      %v272 = vsel %vm266, %v271, %v270
      %vm273 = vcmp.lt.s32.totalorder %v257, 0
      %v274 = vsub.s32 0, %v257
      %v275 = vsel %vm273, %v274, %v257
      %v276 = vshrl.u32 %v275, 3
      %v277 = vand.u32 %v275, 7
      %v278 = vsub.s32 0, %v277
      %v279 = vsel %vm273, %v278, %v277
      %vm280 = vcmp.lt.s32.totalorder %v258, 0
      %v281 = vsub.s32 0, %v258
      %v282 = vsel %vm280, %v281, %v258
      %v283 = vshrl.u32 %v282, 3
      %v284 = vand.u32 %v282, 7
      %v285 = vsub.s32 0, %v284
      %v286 = vsel %vm280, %v285, %v284
      %vm287 = vcmp.ne.s32.totalorder %v265, 0
      %vm288 = vcmp.ne.s32.totalorder %v272, 0
      %vm289 = vcmp.ne.s32.totalorder %v279, 0
      %vm290 = vcmp.ne.s32.totalorder %v286, 0
      %vm291 = vcmp.lt.s32.totalorder %v265, 0
      %vm292 = vcmp.lt.s32.totalorder %v272, 0
      %vm293 = vcmp.lt.s32.totalorder %v279, 0
      %vm294 = vcmp.lt.s32.totalorder %v286, 0
      %vm295 = vmand %vm291, %vm287
      %vm296 = vmand %vm292, %vm288
      %vm297 = vmand %vm293, %vm289
      %vm298 = vmand %vm294, %vm290
      %v299 = vadd.s32 %v265, 8
      %v300 = vadd.s32 %v272, 8
      %v301 = vadd.s32 %v279, 8
      %v302 = vadd.s32 %v286, 8
      %v303 = vsel %vm295, %v299, %v265
      %v304 = vsel %vm296, %v300, %v272
      %v305 = vsel %vm297, %v301, %v279
      %v306 = vsel %vm298, %v302, %v286
      %vm307 = vcmp.ne.s32.totalorder %v303, 7
      %vm308 = vcmp.ne.s32.totalorder %v304, 7
      %vm309 = vcmp.ne.s32.totalorder %v305, 7
      %vm310 = vcmp.ne.s32.totalorder %v306, 7
      %v311 = vsel %vm307, 1.0, 0.0
      %v312 = vsel %vm308, 1.0, 0.0
      %v313 = vsel %vm309, 1.0, 0.0
      %v314 = vsel %vm310, 1.0, 0.0
      %vm319 = vcmask 1046528
      %v320 = vrot.slane %v250, 1
      %v321 = vrot.slane %v251, 1
      %v322 = vsel %vm319, %v320, %v321
      %v323 = vrot.slane %v252, 1
      %v324 = vsel %vm319, %v321, %v323
      %v325 = vrot.slane %v253, 1
      %v326 = vsel %vm319, %v323, %v325
      %v331 = vsel %vm319, %v325, 0.0
      %v332 = vmul.f32 %v322, %v311
      %v333 = vmul.f32 %v324, %v312
      %v334 = vmul.f32 %v326, %v313
      %v335 = vmul.f32 %v331, %v314
      %v336 = vld [vmem:[%s2] sm:$0xff]
      %v337 = vld [vmem:[%s2 + $0x8] sm:$0xff]
      %v338 = vld [vmem:[%s2 + $0x10] sm:$0xff]
      %v339 = vld [vmem:[%s2 + $0x18] sm:$0xff]
      %v340 = vld [vmem:[%s2 + $0x20] sm:$0xff]
      %v341 = vld [vmem:[%s2 + $0x28] sm:$0xff]
      %v342 = vld [vmem:[%s2 + $0x30] sm:$0xff]
      %v343 = vld [vmem:[%s2 + $0x38] sm:$0xff]
      %vm344 = vcmask 523264
      %v345 = vsel %vm344, %v250, 0
      %v347 = vsel %vm344, %v251, 0
      %v349 = vsel %vm344, %v252, 0
      %v351 = vsel %vm344, %v253, 0
      %353 = vmatprep.subr.mxu0 0.0
      %354 = vmatpush1.msra.mxu0 %v336
      %355 = vmatprep.subr.mxu0 0.0
      %356 = vmatpush1.msra.mxu0 %v337
      %357 = vmatprep.subr.mxu0 0.0
      %358 = vmatpush1.msra.mxu0 %v338
      %359 = vmatprep.subr.mxu0 0.0
      %360 = vmatpush1.msra.mxu0 %v339
      %361 = vmatprep.subr.mxu0 0.0
      %362 = vmatpush1.msra.mxu0 %v340
      %363 = vmatprep.subr.mxu0 0.0
      %364 = vmatpush1.msra.mxu0 %v341
      %365 = vmatprep.subr.mxu0 0.0
      %366 = vmatpush1.msra.mxu0 %v342
      %367 = vmatprep.subr.mxu0 0.0
      %368 = vmatpush1.msra.mxu0 %v343
      %369 = vmatprep.subr.mxu0 0.0
      %370 = vmatpush1.msra.mxu0 0.0
      %371 = vmatprep.subr.mxu0 0.0
      %372 = vmatpush1.msra.mxu0 0.0
      %373 = vmatprep.subr.mxu0 0.0
      %374 = vmatpush1.msra.mxu0 0.0
      %375 = vmatprep.subr.mxu0 0.0
      %376 = vmatpush1.msra.mxu0 0.0
      %377 = vmatprep.subr.mxu0 0.0
      %378 = vmatpush1.msra.mxu0 0.0
      %379 = vmatprep.subr.mxu0 0.0
      %380 = vmatpush1.msra.mxu0 0.0
      %381 = vmatprep.subr.mxu0 0.0
      %382 = vmatpush1.msra.mxu0 0.0
      %383 = vmatprep.subr.mxu0 0.0
      %384 = vmatpush1.msra.mxu0 0.0
      %385 = vmatprep.subr.mxu0 0.0
      %386 = vmatpush1.msra.mxu0 0.0
      %387 = vmatprep.subr.mxu0 0.0
      %388 = vmatpush1.msra.mxu0 0.0
      %389 = vmatprep.subr.mxu0 0.0
      %390 = vmatpush1.msra.mxu0 0.0
      %391 = vmatprep.subr.mxu0 0.0
      %392 = vmatpush1.msra.mxu0 0.0
      %393 = vmatprep.subr.mxu0 0.0
      %394 = vmatpush1.msra.mxu0 0.0
      %395 = vmatprep.subr.mxu0 0.0
      %396 = vmatpush1.msra.mxu0 0.0
      %397 = vmatprep.subr.mxu0 0.0
      %398 = vmatpush1.msra.mxu0 0.0
      %399 = vmatprep.subr.mxu0 0.0
      %400 = vmatpush1.msra.mxu0 0.0
      %401 = vmatprep.subr.mxu0 0.0
      %402 = vmatpush1.msra.mxu0 0.0
      %403 = vmatprep.subr.mxu0 0.0
      %404 = vmatpush1.msra.mxu0 0.0
      %405 = vmatprep.subr.mxu0 0.0
      %406 = vmatpush1.msra.mxu0 0.0
      %407 = vmatprep.subr.mxu0 0.0
      %408 = vmatpush1.msra.mxu0 0.0
      %409 = vmatprep.subr.mxu0 0.0
      %410 = vmatpush1.msra.mxu0 0.0
      %411 = vmatprep.subr.mxu0 0.0
      %412 = vmatpush1.msra.mxu0 0.0
      %413 = vmatprep.subr.mxu0 0.0
      %414 = vmatpush1.msra.mxu0 0.0
      %415 = vmatprep.subr.mxu0 0.0
      %416 = vmatpush1.msra.mxu0 0.0
      %417 = vmatprep.mubr.f32.mxu0 0.0
      %418 = vmatmul.mubr.f32.gmra.mrb[0].mxu0 %v345
      %v419 = vpop.f32.mrb[0].mxu0
      %v420 = vadd.f32 0.0, %v419
      %v421 = vpop.f32.mrb[0].mxu0
      %422 = vmatprep.mubr.f32.mxu0 0.0
      %423 = vmatmul.mubr.f32.gmra.mrb[0].mxu0 %v347
      %v424 = vpop.f32.mrb[0].mxu0
      %v425 = vadd.f32 0.0, %v424
      %v426 = vpop.f32.mrb[0].mxu0
      %427 = vmatprep.mubr.f32.mxu0 0.0
      %428 = vmatmul.mubr.f32.gmra.mrb[0].mxu0 %v349
      %v429 = vpop.f32.mrb[0].mxu0
      %v430 = vadd.f32 0.0, %v429
      %v431 = vpop.f32.mrb[0].mxu0
      %432 = vmatprep.mubr.f32.mxu0 0.0
      %433 = vmatmul.mubr.f32.gmra.mrb[0].mxu0 %v351
      %v434 = vpop.f32.mrb[0].mxu0
      %v435 = vadd.f32 0.0, %v434
      %v436 = vpop.f32.mrb[0].mxu0
      %437 = vdwg.mxu0
      %s438 = scalar_lea.vmem %s2, 64
      %v439 = vld [vmem:[%s438] sm:$0xff]
      %v440 = vld [vmem:[%s438 + $0x8] sm:$0xff]
      %v441 = vld [vmem:[%s438 + $0x10] sm:$0xff]
      %v442 = vld [vmem:[%s438 + $0x18] sm:$0xff]
      %v443 = vld [vmem:[%s438 + $0x20] sm:$0xff]
      %v444 = vld [vmem:[%s438 + $0x28] sm:$0xff]
      %v445 = vld [vmem:[%s438 + $0x30] sm:$0xff]
      %v446 = vld [vmem:[%s438 + $0x38] sm:$0xff]
      %s447 = scalar_lea.vmem %s2, 128
      %v448 = vld [vmem:[%s447] sm:$0xff]
      %v449 = vld [vmem:[%s447 + $0x8] sm:$0xff]
      %v450 = vld [vmem:[%s447 + $0x10] sm:$0xff]
      %v451 = vld [vmem:[%s447 + $0x18] sm:$0xff]
      %v452 = vld [vmem:[%s447 + $0x20] sm:$0xff]
      %v453 = vld [vmem:[%s447 + $0x28] sm:$0xff]
      %v454 = vld [vmem:[%s447 + $0x30] sm:$0xff]
      %v455 = vld [vmem:[%s447 + $0x38] sm:$0xff]
      %v457 = vsel %vm344, %v332, 0
      %v460 = vsel %vm344, %v333, 0
      %v463 = vsel %vm344, %v334, 0
      %v466 = vsel %vm344, %v335, 0
      %468 = vmatprep.subr.mxu0 0.0
      %469 = vmatpush1.msra.mxu0 %v448
      %470 = vmatprep.subr.mxu0 0.0
      %471 = vmatpush1.msra.mxu0 %v449
      %472 = vmatprep.subr.mxu0 0.0
      %473 = vmatpush1.msra.mxu0 %v450
      %474 = vmatprep.subr.mxu0 0.0
      %475 = vmatpush1.msra.mxu0 %v451
      %476 = vmatprep.subr.mxu0 0.0
      %477 = vmatpush1.msra.mxu0 %v452
      %478 = vmatprep.subr.mxu0 0.0
      %479 = vmatpush1.msra.mxu0 %v453
      %480 = vmatprep.subr.mxu0 0.0
      %481 = vmatpush1.msra.mxu0 %v454
      %482 = vmatprep.subr.mxu0 0.0
      %483 = vmatpush1.msra.mxu0 %v455
      %484 = vmatprep.subr.mxu0 0.0
      %485 = vmatpush1.msra.mxu0 0.0
      %486 = vmatprep.subr.mxu0 0.0
      %487 = vmatpush1.msra.mxu0 0.0
      %488 = vmatprep.subr.mxu0 0.0
      %489 = vmatpush1.msra.mxu0 0.0
      %490 = vmatprep.subr.mxu0 0.0
      %491 = vmatpush1.msra.mxu0 0.0
      %492 = vmatprep.subr.mxu0 0.0
      %493 = vmatpush1.msra.mxu0 0.0
      %494 = vmatprep.subr.mxu0 0.0
      %495 = vmatpush1.msra.mxu0 0.0
      %496 = vmatprep.subr.mxu0 0.0
      %497 = vmatpush1.msra.mxu0 0.0
      %498 = vmatprep.subr.mxu0 0.0
      %499 = vmatpush1.msra.mxu0 0.0
      %500 = vmatprep.subr.mxu0 0.0
      %501 = vmatpush1.msra.mxu0 0.0
      %502 = vmatprep.subr.mxu0 0.0
      %503 = vmatpush1.msra.mxu0 0.0
      %504 = vmatprep.subr.mxu0 0.0
      %505 = vmatpush1.msra.mxu0 0.0
      %506 = vmatprep.subr.mxu0 0.0
      %507 = vmatpush1.msra.mxu0 0.0
      %508 = vmatprep.subr.mxu0 0.0
      %509 = vmatpush1.msra.mxu0 0.0
      %510 = vmatprep.subr.mxu0 0.0
      %511 = vmatpush1.msra.mxu0 0.0
      %512 = vmatprep.subr.mxu0 0.0
      %513 = vmatpush1.msra.mxu0 0.0
      %514 = vmatprep.subr.mxu0 0.0
      %515 = vmatpush1.msra.mxu0 0.0
      %516 = vmatprep.subr.mxu0 0.0
      %517 = vmatpush1.msra.mxu0 0.0
      %518 = vmatprep.subr.mxu0 0.0
      %519 = vmatpush1.msra.mxu0 0.0
      %520 = vmatprep.subr.mxu0 0.0
      %521 = vmatpush1.msra.mxu0 0.0
      %522 = vmatprep.subr.mxu0 0.0
      %523 = vmatpush1.msra.mxu0 0.0
      %524 = vmatprep.subr.mxu0 0.0
      %525 = vmatpush1.msra.mxu0 0.0
      %526 = vmatprep.subr.mxu0 0.0
      %527 = vmatpush1.msra.mxu0 0.0
      %528 = vmatprep.subr.mxu0 0.0
      %529 = vmatpush1.msra.mxu0 0.0
      %530 = vmatprep.subr.mxu0 0.0
      %531 = vmatpush1.msra.mxu0 0.0
      %532 = vmatprep.mubr.f32.mxu0 0.0
      %533 = vmatmul.mubr.f32.gmra.mrb[0].mxu0 %v457
      %v534 = vpop.f32.mrb[0].mxu0
      %v535 = vadd.f32 0.0, %v534
      %v536 = vpop.f32.mrb[0].mxu0
      %537 = vmatprep.mubr.f32.mxu0 0.0
      %538 = vmatmul.mubr.f32.gmra.mrb[0].mxu0 %v460
      %v539 = vpop.f32.mrb[0].mxu0
      %v540 = vadd.f32 0.0, %v539
      %v541 = vpop.f32.mrb[0].mxu0
      %542 = vmatprep.mubr.f32.mxu0 0.0
      %543 = vmatmul.mubr.f32.gmra.mrb[0].mxu0 %v463
      %v544 = vpop.f32.mrb[0].mxu0
      %v545 = vadd.f32 0.0, %v544
      %v546 = vpop.f32.mrb[0].mxu0
      %547 = vmatprep.mubr.f32.mxu0 0.0
      %548 = vmatmul.mubr.f32.gmra.mrb[0].mxu0 %v466
      %v549 = vpop.f32.mrb[0].mxu0
      %v550 = vadd.f32 0.0, %v549
      %v551 = vpop.f32.mrb[0].mxu0
      %552 = vdwg.mxu0
      %553 = vmatprep.subr.mxu0 0.0
      %554 = vmatpush1.msra.mxu0 %v439
      %555 = vmatprep.subr.mxu0 0.0
      %556 = vmatpush1.msra.mxu0 %v440
      %557 = vmatprep.subr.mxu0 0.0
      %558 = vmatpush1.msra.mxu0 %v441
      %559 = vmatprep.subr.mxu0 0.0
      %560 = vmatpush1.msra.mxu0 %v442
      %561 = vmatprep.subr.mxu0 0.0
      %562 = vmatpush1.msra.mxu0 %v443
      %563 = vmatprep.subr.mxu0 0.0
      %564 = vmatpush1.msra.mxu0 %v444
      %565 = vmatprep.subr.mxu0 0.0
      %566 = vmatpush1.msra.mxu0 %v445
      %567 = vmatprep.subr.mxu0 0.0
      %568 = vmatpush1.msra.mxu0 %v446
      %569 = vmatprep.subr.mxu0 0.0
      %570 = vmatpush1.msra.mxu0 0.0
      %571 = vmatprep.subr.mxu0 0.0
      %572 = vmatpush1.msra.mxu0 0.0
      %573 = vmatprep.subr.mxu0 0.0
      %574 = vmatpush1.msra.mxu0 0.0
      %575 = vmatprep.subr.mxu0 0.0
      %576 = vmatpush1.msra.mxu0 0.0
      %577 = vmatprep.subr.mxu0 0.0
      %578 = vmatpush1.msra.mxu0 0.0
      %579 = vmatprep.subr.mxu0 0.0
      %580 = vmatpush1.msra.mxu0 0.0
      %581 = vmatprep.subr.mxu0 0.0
      %582 = vmatpush1.msra.mxu0 0.0
      %583 = vmatprep.subr.mxu0 0.0
      %584 = vmatpush1.msra.mxu0 0.0
      %585 = vmatprep.subr.mxu0 0.0
      %586 = vmatpush1.msra.mxu0 0.0
      %587 = vmatprep.subr.mxu0 0.0
      %588 = vmatpush1.msra.mxu0 0.0
      %589 = vmatprep.subr.mxu0 0.0
      %590 = vmatpush1.msra.mxu0 0.0
      %591 = vmatprep.subr.mxu0 0.0
      %592 = vmatpush1.msra.mxu0 0.0
      %593 = vmatprep.subr.mxu0 0.0
      %594 = vmatpush1.msra.mxu0 0.0
      %595 = vmatprep.subr.mxu0 0.0
      %596 = vmatpush1.msra.mxu0 0.0
      %597 = vmatprep.subr.mxu0 0.0
      %598 = vmatpush1.msra.mxu0 0.0
      %599 = vmatprep.subr.mxu0 0.0
      %600 = vmatpush1.msra.mxu0 0.0
      %601 = vmatprep.subr.mxu0 0.0
      %602 = vmatpush1.msra.mxu0 0.0
      %603 = vmatprep.subr.mxu0 0.0
      %604 = vmatpush1.msra.mxu0 0.0
      %605 = vmatprep.subr.mxu0 0.0
      %606 = vmatpush1.msra.mxu0 0.0
      %607 = vmatprep.subr.mxu0 0.0
      %608 = vmatpush1.msra.mxu0 0.0
      %609 = vmatprep.subr.mxu0 0.0
      %610 = vmatpush1.msra.mxu0 0.0
      %611 = vmatprep.subr.mxu0 0.0
      %612 = vmatpush1.msra.mxu0 0.0
      %613 = vmatprep.subr.mxu0 0.0
      %614 = vmatpush1.msra.mxu0 0.0
      %615 = vmatprep.subr.mxu0 0.0
      %616 = vmatpush1.msra.mxu0 0.0
      %617 = vmatprep.mubr.f32.mxu0 0.0
      %618 = vmatmul.mubr.f32.gmra.mrb[0].mxu0 %v345
      %v619 = vpop.f32.mrb[0].mxu0
      %v620 = vadd.f32 %v535, %v619
      %v621 = vpop.f32.mrb[0].mxu0
      %622 = vmatprep.mubr.f32.mxu0 0.0
      %623 = vmatmul.mubr.f32.gmra.mrb[0].mxu0 %v347
      %v624 = vpop.f32.mrb[0].mxu0
      %v625 = vadd.f32 %v540, %v624
      %v626 = vpop.f32.mrb[0].mxu0
      %627 = vmatprep.mubr.f32.mxu0 0.0
      %628 = vmatmul.mubr.f32.gmra.mrb[0].mxu0 %v349
      %v629 = vpop.f32.mrb[0].mxu0
      %v630 = vadd.f32 %v545, %v629
      %v631 = vpop.f32.mrb[0].mxu0
      %632 = vmatprep.mubr.f32.mxu0 0.0
      %633 = vmatmul.mubr.f32.gmra.mrb[0].mxu0 %v351
      %v634 = vpop.f32.mrb[0].mxu0
      %v635 = vadd.f32 %v550, %v634
      %v636 = vpop.f32.mrb[0].mxu0
      %637 = vdwg.mxu0
      %vm638 = vcmp.gt.f32.partialorder %v420, 0.0
      %vm639 = vcmp.gt.f32.partialorder %v425, 0.0
      %vm640 = vcmp.gt.f32.partialorder %v430, 0.0
      %vm641 = vcmp.gt.f32.partialorder %v435, 0.0
      %v642 = vmul.f32 %v420, 0.1
      %v643 = vmul.f32 %v425, 0.1
      %v644 = vmul.f32 %v430, 0.1
      %v645 = vmul.f32 %v435, 0.1
      %v646 = vsel %vm638, %v420, %v642
      %v647 = vsel %vm639, %v425, %v643
      %v648 = vsel %vm640, %v430, %v644
      %v649 = vsel %vm641, %v435, %v645
      %vm650 = vcmp.gt.f32.partialorder %v620, 0.0
      %vm651 = vcmp.gt.f32.partialorder %v625, 0.0
      %vm652 = vcmp.gt.f32.partialorder %v630, 0.0
      %vm653 = vcmp.gt.f32.partialorder %v635, 0.0
      %v654 = vmul.f32 %v620, 0.1
      %v655 = vmul.f32 %v625, 0.1
      %v656 = vmul.f32 %v630, 0.1
      %v657 = vmul.f32 %v635, 0.1
      %v658 = vsel %vm650, %v620, %v654
      %v659 = vsel %vm651, %v625, %v655
      %v660 = vsel %vm652, %v630, %v656
      %v661 = vsel %vm653, %v635, %v657
      %v666 = vcombine.high %v646, %v646
      %v668 = vunpack.c.l.s4 1966171168
      %v669 = vunpack.c.0.s8 %v668
      %v670 = vlaneseq
      %v671 = vshrl.u32 %v670, 7
      %v672 = vsub.s32 %v669, %v671
      %v673 = vrot.slane %v646, %v672
      %v675 = vunpack.c.l.s4 1966171168
      %v676 = vunpack.c.0.s8 %v675
      %v677 = vlaneseq
      %v678 = vshrl.u32 %v677, 7
      %v679 = vsub.s32 %v676, %v678
      %v680 = vrot.slane %v666, %v679
      %v681 = vcombine.high %v673, %v673
      %v682 = vcombine.high %v680, %v680
      %v684 = vunpack.c.l.s4 1966171168
      %v685 = vunpack.c.0.s8 %v684
      %v686 = vlaneseq
      %v687 = vshrl.u32 %v686, 7
      %v688 = vsub.s32 %v685, %v687
      %v689 = vrot.slane %v673, %v688
      %v691 = vunpack.c.l.s4 1966171168
      %v692 = vunpack.c.0.s8 %v691
      %v693 = vlaneseq
      %v694 = vshrl.u32 %v693, 7
      %v695 = vsub.s32 %v692, %v694
      %v696 = vrot.slane %v680, %v695
      %v698 = vunpack.c.l.s4 1966171168
      %v699 = vunpack.c.0.s8 %v698
      %v700 = vlaneseq
      %v701 = vshrl.u32 %v700, 7
      %v702 = vsub.s32 %v699, %v701
      %v703 = vrot.slane %v681, %v702
      %v705 = vunpack.c.l.s4 1966171168
      %v706 = vunpack.c.0.s8 %v705
      %v707 = vlaneseq
      %v708 = vshrl.u32 %v707, 7
      %v709 = vsub.s32 %v706, %v708
      %v710 = vrot.slane %v682, %v709
      %v711 = vcombine.high %v689, %v689
      %v712 = vcombine.high %v696, %v696
      %v713 = vcombine.high %v703, %v703
      %v714 = vcombine.high %v710, %v710
      %v715 = vcombine.high %v647, %v647
      %v717 = vunpack.c.l.s4 1966171168
      %v718 = vunpack.c.0.s8 %v717
      %v719 = vlaneseq
      %v720 = vshrl.u32 %v719, 7
      %v721 = vsub.s32 %v718, %v720
      %v722 = vrot.slane %v647, %v721
      %v724 = vunpack.c.l.s4 1966171168
      %v725 = vunpack.c.0.s8 %v724
      %v726 = vlaneseq
      %v727 = vshrl.u32 %v726, 7
      %v728 = vsub.s32 %v725, %v727
      %v729 = vrot.slane %v715, %v728
      %v730 = vcombine.high %v722, %v722
      %v731 = vcombine.high %v729, %v729
      %v733 = vunpack.c.l.s4 1966171168
      %v734 = vunpack.c.0.s8 %v733
      %v735 = vlaneseq
      %v736 = vshrl.u32 %v735, 7
      %v737 = vsub.s32 %v734, %v736
      %v738 = vrot.slane %v722, %v737
      %v740 = vunpack.c.l.s4 1966171168
      %v741 = vunpack.c.0.s8 %v740
      %v742 = vlaneseq
      %v743 = vshrl.u32 %v742, 7
      %v744 = vsub.s32 %v741, %v743
      %v745 = vrot.slane %v729, %v744
      %v747 = vunpack.c.l.s4 1966171168
      %v748 = vunpack.c.0.s8 %v747
      %v749 = vlaneseq
      %v750 = vshrl.u32 %v749, 7
      %v751 = vsub.s32 %v748, %v750
      %v752 = vrot.slane %v730, %v751
      %v754 = vunpack.c.l.s4 1966171168
      %v755 = vunpack.c.0.s8 %v754
      %v756 = vlaneseq
      %v757 = vshrl.u32 %v756, 7
      %v758 = vsub.s32 %v755, %v757
      %v759 = vrot.slane %v731, %v758
      %v760 = vcombine.high %v738, %v738
      %v761 = vcombine.high %v745, %v745
      %v762 = vcombine.high %v752, %v752
      %v763 = vcombine.high %v759, %v759
      %v764 = vcombine.high %v648, %v648
      %v766 = vunpack.c.l.s4 1966171168
      %v767 = vunpack.c.0.s8 %v766
      %v768 = vlaneseq
      %v769 = vshrl.u32 %v768, 7
      %v770 = vsub.s32 %v767, %v769
      %v771 = vrot.slane %v648, %v770
      %v773 = vunpack.c.l.s4 1966171168
      %v774 = vunpack.c.0.s8 %v773
      %v775 = vlaneseq
      %v776 = vshrl.u32 %v775, 7
      %v777 = vsub.s32 %v774, %v776
      %v778 = vrot.slane %v764, %v777
      %v779 = vcombine.high %v771, %v771
      %v780 = vcombine.high %v778, %v778
      %v782 = vunpack.c.l.s4 1966171168
      %v783 = vunpack.c.0.s8 %v782
      %v784 = vlaneseq
      %v785 = vshrl.u32 %v784, 7
      %v786 = vsub.s32 %v783, %v785
      %v787 = vrot.slane %v771, %v786
      %v789 = vunpack.c.l.s4 1966171168
      %v790 = vunpack.c.0.s8 %v789
      %v791 = vlaneseq
      %v792 = vshrl.u32 %v791, 7
      %v793 = vsub.s32 %v790, %v792
      %v794 = vrot.slane %v778, %v793
      %v796 = vunpack.c.l.s4 1966171168
      %v797 = vunpack.c.0.s8 %v796
      %v798 = vlaneseq
      %v799 = vshrl.u32 %v798, 7
      %v800 = vsub.s32 %v797, %v799
      %v801 = vrot.slane %v779, %v800
      %v803 = vunpack.c.l.s4 1966171168
      %v804 = vunpack.c.0.s8 %v803
      %v805 = vlaneseq
      %v806 = vshrl.u32 %v805, 7
      %v807 = vsub.s32 %v804, %v806
      %v808 = vrot.slane %v780, %v807
      %v809 = vcombine.high %v787, %v787
      %v810 = vcombine.high %v794, %v794
      %v811 = vcombine.high %v801, %v801
      %v812 = vcombine.high %v808, %v808
      %v813 = vcombine.high %v649, %v649
      %v815 = vunpack.c.l.s4 1966171168
      %v816 = vunpack.c.0.s8 %v815
      %v817 = vlaneseq
      %v818 = vshrl.u32 %v817, 7
      %v819 = vsub.s32 %v816, %v818
      %v820 = vrot.slane %v649, %v819
      %v822 = vunpack.c.l.s4 1966171168
      %v823 = vunpack.c.0.s8 %v822
      %v824 = vlaneseq
      %v825 = vshrl.u32 %v824, 7
      %v826 = vsub.s32 %v823, %v825
      %v827 = vrot.slane %v813, %v826
      %v828 = vcombine.high %v820, %v820
      %v829 = vcombine.high %v827, %v827
      %v831 = vunpack.c.l.s4 1966171168
      %v832 = vunpack.c.0.s8 %v831
      %v833 = vlaneseq
      %v834 = vshrl.u32 %v833, 7
      %v835 = vsub.s32 %v832, %v834
      %v836 = vrot.slane %v820, %v835
      %v838 = vunpack.c.l.s4 1966171168
      %v839 = vunpack.c.0.s8 %v838
      %v840 = vlaneseq
      %v841 = vshrl.u32 %v840, 7
      %v842 = vsub.s32 %v839, %v841
      %v843 = vrot.slane %v827, %v842
      %v845 = vunpack.c.l.s4 1966171168
      %v846 = vunpack.c.0.s8 %v845
      %v847 = vlaneseq
      %v848 = vshrl.u32 %v847, 7
      %v849 = vsub.s32 %v846, %v848
      %v850 = vrot.slane %v828, %v849
      %v852 = vunpack.c.l.s4 1966171168
      %v853 = vunpack.c.0.s8 %v852
      %v854 = vlaneseq
      %v855 = vshrl.u32 %v854, 7
      %v856 = vsub.s32 %v853, %v855
      %v857 = vrot.slane %v829, %v856
      %v858 = vcombine.high %v836, %v836
      %v859 = vcombine.high %v843, %v843
      %v860 = vcombine.high %v850, %v850
      %v861 = vcombine.high %v857, %v857
      %v898 = vcombine.high %v658, %v658
      %v900 = vunpack.c.l.s4 1966171168
      %v901 = vunpack.c.0.s8 %v900
      %v902 = vlaneseq
      %v903 = vshrl.u32 %v902, 7
      %v904 = vsub.s32 %v901, %v903
      %v905 = vrot.slane %v658, %v904
      %v907 = vunpack.c.l.s4 1966171168
      %v908 = vunpack.c.0.s8 %v907
      %v909 = vlaneseq
      %v910 = vshrl.u32 %v909, 7
      %v911 = vsub.s32 %v908, %v910
      %v912 = vrot.slane %v898, %v911
      %v913 = vcombine.high %v905, %v905
      %v914 = vcombine.high %v912, %v912
      %v916 = vunpack.c.l.s4 1966171168
      %v917 = vunpack.c.0.s8 %v916
      %v918 = vlaneseq
      %v919 = vshrl.u32 %v918, 7
      %v920 = vsub.s32 %v917, %v919
      %v921 = vrot.slane %v905, %v920
      %v923 = vunpack.c.l.s4 1966171168
      %v924 = vunpack.c.0.s8 %v923
      %v925 = vlaneseq
      %v926 = vshrl.u32 %v925, 7
      %v927 = vsub.s32 %v924, %v926
      %v928 = vrot.slane %v912, %v927
      %v930 = vunpack.c.l.s4 1966171168
      %v931 = vunpack.c.0.s8 %v930
      %v932 = vlaneseq
      %v933 = vshrl.u32 %v932, 7
      %v934 = vsub.s32 %v931, %v933
      %v935 = vrot.slane %v913, %v934
      %v937 = vunpack.c.l.s4 1966171168
      %v938 = vunpack.c.0.s8 %v937
      %v939 = vlaneseq
      %v940 = vshrl.u32 %v939, 7
      %v941 = vsub.s32 %v938, %v940
      %v942 = vrot.slane %v914, %v941
      %v943 = vcombine.high %v921, %v921
      %v944 = vcombine.high %v928, %v928
      %v945 = vcombine.high %v935, %v935
      %v946 = vcombine.high %v942, %v942
      %v947 = vcombine.high %v659, %v659
      %v949 = vunpack.c.l.s4 1966171168
      %v950 = vunpack.c.0.s8 %v949
      %v951 = vlaneseq
      %v952 = vshrl.u32 %v951, 7
      %v953 = vsub.s32 %v950, %v952
      %v954 = vrot.slane %v659, %v953
      %v956 = vunpack.c.l.s4 1966171168
      %v957 = vunpack.c.0.s8 %v956
      %v958 = vlaneseq
      %v959 = vshrl.u32 %v958, 7
      %v960 = vsub.s32 %v957, %v959
      %v961 = vrot.slane %v947, %v960
      %v962 = vcombine.high %v954, %v954
      %v963 = vcombine.high %v961, %v961
      %v965 = vunpack.c.l.s4 1966171168
      %v966 = vunpack.c.0.s8 %v965
      %v967 = vlaneseq
      %v968 = vshrl.u32 %v967, 7
      %v969 = vsub.s32 %v966, %v968
      %v970 = vrot.slane %v954, %v969
      %v972 = vunpack.c.l.s4 1966171168
      %v973 = vunpack.c.0.s8 %v972
      %v974 = vlaneseq
      %v975 = vshrl.u32 %v974, 7
      %v976 = vsub.s32 %v973, %v975
      %v977 = vrot.slane %v961, %v976
      %v979 = vunpack.c.l.s4 1966171168
      %v980 = vunpack.c.0.s8 %v979
      %v981 = vlaneseq
      %v982 = vshrl.u32 %v981, 7
      %v983 = vsub.s32 %v980, %v982
      %v984 = vrot.slane %v962, %v983
      %v986 = vunpack.c.l.s4 1966171168
      %v987 = vunpack.c.0.s8 %v986
      %v988 = vlaneseq
      %v989 = vshrl.u32 %v988, 7
      %v990 = vsub.s32 %v987, %v989
      %v991 = vrot.slane %v963, %v990
      %v992 = vcombine.high %v970, %v970
      %v993 = vcombine.high %v977, %v977
      %v994 = vcombine.high %v984, %v984
      %v995 = vcombine.high %v991, %v991
      %v996 = vcombine.high %v660, %v660
      %v998 = vunpack.c.l.s4 1966171168
      %v999 = vunpack.c.0.s8 %v998
      %v1000 = vlaneseq
      %v1001 = vshrl.u32 %v1000, 7
      %v1002 = vsub.s32 %v999, %v1001
      %v1003 = vrot.slane %v660, %v1002
      %v1005 = vunpack.c.l.s4 1966171168
      %v1006 = vunpack.c.0.s8 %v1005
      %v1007 = vlaneseq
      %v1008 = vshrl.u32 %v1007, 7
      %v1009 = vsub.s32 %v1006, %v1008
      %v1010 = vrot.slane %v996, %v1009
      %v1011 = vcombine.high %v1003, %v1003
      %v1012 = vcombine.high %v1010, %v1010
      %v1014 = vunpack.c.l.s4 1966171168
      %v1015 = vunpack.c.0.s8 %v1014
      %v1016 = vlaneseq
      %v1017 = vshrl.u32 %v1016, 7
      %v1018 = vsub.s32 %v1015, %v1017
      %v1019 = vrot.slane %v1003, %v1018
      %v1021 = vunpack.c.l.s4 1966171168
      %v1022 = vunpack.c.0.s8 %v1021
      %v1023 = vlaneseq
      %v1024 = vshrl.u32 %v1023, 7
      %v1025 = vsub.s32 %v1022, %v1024
      %v1026 = vrot.slane %v1010, %v1025
      %v1028 = vunpack.c.l.s4 1966171168
      %v1029 = vunpack.c.0.s8 %v1028
      %v1030 = vlaneseq
      %v1031 = vshrl.u32 %v1030, 7
      %v1032 = vsub.s32 %v1029, %v1031
      %v1033 = vrot.slane %v1011, %v1032
      %v1035 = vunpack.c.l.s4 1966171168
      %v1036 = vunpack.c.0.s8 %v1035
      %v1037 = vlaneseq
      %v1038 = vshrl.u32 %v1037, 7
      %v1039 = vsub.s32 %v1036, %v1038
      %v1040 = vrot.slane %v1012, %v1039
      %v1041 = vcombine.high %v1019, %v1019
      %v1042 = vcombine.high %v1026, %v1026
      %v1043 = vcombine.high %v1033, %v1033
      %v1044 = vcombine.high %v1040, %v1040
      %v1045 = vcombine.high %v661, %v661
      %v1047 = vunpack.c.l.s4 1966171168
      %v1048 = vunpack.c.0.s8 %v1047
      %v1049 = vlaneseq
      %v1050 = vshrl.u32 %v1049, 7
      %v1051 = vsub.s32 %v1048, %v1050
      %v1052 = vrot.slane %v661, %v1051
      %v1054 = vunpack.c.l.s4 1966171168
      %v1055 = vunpack.c.0.s8 %v1054
      %v1056 = vlaneseq
      %v1057 = vshrl.u32 %v1056, 7
      %v1058 = vsub.s32 %v1055, %v1057
      %v1059 = vrot.slane %v1045, %v1058
      %v1060 = vcombine.high %v1052, %v1052
      %v1061 = vcombine.high %v1059, %v1059
      %v1063 = vunpack.c.l.s4 1966171168
      %v1064 = vunpack.c.0.s8 %v1063
      %v1065 = vlaneseq
      %v1066 = vshrl.u32 %v1065, 7
      %v1067 = vsub.s32 %v1064, %v1066
      %v1068 = vrot.slane %v1052, %v1067
      %v1070 = vunpack.c.l.s4 1966171168
      %v1071 = vunpack.c.0.s8 %v1070
      %v1072 = vlaneseq
      %v1073 = vshrl.u32 %v1072, 7
      %v1074 = vsub.s32 %v1071, %v1073
      %v1075 = vrot.slane %v1059, %v1074
      %v1077 = vunpack.c.l.s4 1966171168
      %v1078 = vunpack.c.0.s8 %v1077
      %v1079 = vlaneseq
      %v1080 = vshrl.u32 %v1079, 7
      %v1081 = vsub.s32 %v1078, %v1080
      %v1082 = vrot.slane %v1060, %v1081
      %v1084 = vunpack.c.l.s4 1966171168
      %v1085 = vunpack.c.0.s8 %v1084
      %v1086 = vlaneseq
      %v1087 = vshrl.u32 %v1086, 7
      %v1088 = vsub.s32 %v1085, %v1087
      %v1089 = vrot.slane %v1061, %v1088
      %v1090 = vcombine.high %v1068, %v1068
      %v1091 = vcombine.high %v1075, %v1075
      %v1092 = vcombine.high %v1082, %v1082
      %v1093 = vcombine.high %v1089, %v1089
      %v1094 = vlaneseq
      %v1095 = vshrl.u32 %v1094, 7
      %v1096 = vsub.s32 0, %v1095
      %v1097 = vrot.slane %v921, %v1096
      %v1098 = vlaneseq
      %v1099 = vshrl.u32 %v1098, 7
      %v1100 = vsub.s32 0, %v1099
      %v1101 = vrot.slane %v935, %v1100
      %v1102 = vlaneseq
      %v1103 = vshrl.u32 %v1102, 7
      %v1104 = vsub.s32 0, %v1103
      %v1105 = vrot.slane %v943, %v1104
      %v1106 = vlaneseq
      %v1107 = vshrl.u32 %v1106, 7
      %v1108 = vsub.s32 0, %v1107
      %v1109 = vrot.slane %v945, %v1108
      %v1110 = vlaneseq
      %v1111 = vshrl.u32 %v1110, 7
      %v1112 = vsub.s32 0, %v1111
      %v1113 = vrot.slane %v928, %v1112
      %v1114 = vlaneseq
      %v1115 = vshrl.u32 %v1114, 7
      %v1116 = vsub.s32 0, %v1115
      %v1117 = vrot.slane %v942, %v1116
      %v1118 = vlaneseq
      %v1119 = vshrl.u32 %v1118, 7
      %v1120 = vsub.s32 0, %v1119
      %v1121 = vrot.slane %v944, %v1120
      %v1122 = vlaneseq
      %v1123 = vshrl.u32 %v1122, 7
      %v1124 = vsub.s32 0, %v1123
      %v1125 = vrot.slane %v946, %v1124
      %v1126 = vlaneseq
      %v1127 = vshrl.u32 %v1126, 7
      %v1128 = vsub.s32 0, %v1127
      %v1129 = vrot.slane %v970, %v1128
      %v1130 = vlaneseq
      %v1131 = vshrl.u32 %v1130, 7
      %v1132 = vsub.s32 0, %v1131
      %v1133 = vrot.slane %v984, %v1132
      %v1134 = vlaneseq
      %v1135 = vshrl.u32 %v1134, 7
      %v1136 = vsub.s32 0, %v1135
      %v1137 = vrot.slane %v992, %v1136
      %v1138 = vlaneseq
      %v1139 = vshrl.u32 %v1138, 7
      %v1140 = vsub.s32 0, %v1139
      %v1141 = vrot.slane %v994, %v1140
      %v1142 = vlaneseq
      %v1143 = vshrl.u32 %v1142, 7
      %v1144 = vsub.s32 0, %v1143
      %v1145 = vrot.slane %v977, %v1144
      %v1146 = vlaneseq
      %v1147 = vshrl.u32 %v1146, 7
      %v1148 = vsub.s32 0, %v1147
      %v1149 = vrot.slane %v991, %v1148
      %v1150 = vlaneseq
      %v1151 = vshrl.u32 %v1150, 7
      %v1152 = vsub.s32 0, %v1151
      %v1153 = vrot.slane %v993, %v1152
      %v1154 = vlaneseq
      %v1155 = vshrl.u32 %v1154, 7
      %v1156 = vsub.s32 0, %v1155
      %v1157 = vrot.slane %v995, %v1156
      %v1158 = vlaneseq
      %v1159 = vshrl.u32 %v1158, 7
      %v1160 = vsub.s32 0, %v1159
      %v1161 = vrot.slane %v1019, %v1160
      %v1162 = vlaneseq
      %v1163 = vshrl.u32 %v1162, 7
      %v1164 = vsub.s32 0, %v1163
      %v1165 = vrot.slane %v1033, %v1164
      %v1166 = vlaneseq
      %v1167 = vshrl.u32 %v1166, 7
      %v1168 = vsub.s32 0, %v1167
      %v1169 = vrot.slane %v1041, %v1168
      %v1170 = vlaneseq
      %v1171 = vshrl.u32 %v1170, 7
      %v1172 = vsub.s32 0, %v1171
      %v1173 = vrot.slane %v1043, %v1172
      %v1174 = vlaneseq
      %v1175 = vshrl.u32 %v1174, 7
      %v1176 = vsub.s32 0, %v1175
      %v1177 = vrot.slane %v1026, %v1176
      %v1178 = vlaneseq
      %v1179 = vshrl.u32 %v1178, 7
      %v1180 = vsub.s32 0, %v1179
      %v1181 = vrot.slane %v1040, %v1180
      %v1182 = vlaneseq
      %v1183 = vshrl.u32 %v1182, 7
      %v1184 = vsub.s32 0, %v1183
      %v1185 = vrot.slane %v1042, %v1184
      %v1186 = vlaneseq
      %v1187 = vshrl.u32 %v1186, 7
      %v1188 = vsub.s32 0, %v1187
      %v1189 = vrot.slane %v1044, %v1188
      %v1190 = vlaneseq
      %v1191 = vshrl.u32 %v1190, 7
      %v1192 = vsub.s32 0, %v1191
      %v1193 = vrot.slane %v1068, %v1192
      %v1194 = vlaneseq
      %v1195 = vshrl.u32 %v1194, 7
      %v1196 = vsub.s32 0, %v1195
      %v1197 = vrot.slane %v1082, %v1196
      %v1198 = vlaneseq
      %v1199 = vshrl.u32 %v1198, 7
      %v1200 = vsub.s32 0, %v1199
      %v1201 = vrot.slane %v1090, %v1200
      %v1202 = vlaneseq
      %v1203 = vshrl.u32 %v1202, 7
      %v1204 = vsub.s32 0, %v1203
      %v1205 = vrot.slane %v1092, %v1204
      %v1206 = vlaneseq
      %v1207 = vshrl.u32 %v1206, 7
      %v1208 = vsub.s32 0, %v1207
      %v1209 = vrot.slane %v1075, %v1208
      %v1210 = vlaneseq
      %v1211 = vshrl.u32 %v1210, 7
      %v1212 = vsub.s32 0, %v1211
      %v1213 = vrot.slane %v1089, %v1212
      %v1214 = vlaneseq
      %v1215 = vshrl.u32 %v1214, 7
      %v1216 = vsub.s32 0, %v1215
      %v1217 = vrot.slane %v1091, %v1216
      %v1218 = vlaneseq
      %v1219 = vshrl.u32 %v1218, 7
      %v1220 = vsub.s32 0, %v1219
      %v1221 = vrot.slane %v1093, %v1220
      %vm1254 = vcmask 1040384
      %v1255 = vsel %vm1254, %v689, %v1097
      %v1256 = vsel %vm1254, %v703, %v1101
      %v1257 = vsel %vm1254, %v711, %v1105
      %v1258 = vsel %vm1254, %v713, %v1109
      %v1259 = vsel %vm1254, %v696, %v1113
      %v1260 = vsel %vm1254, %v710, %v1117
      %v1261 = vsel %vm1254, %v712, %v1121
      %v1262 = vsel %vm1254, %v714, %v1125
      %v1263 = vsel %vm1254, %v738, %v1129
      %v1264 = vsel %vm1254, %v752, %v1133
      %v1265 = vsel %vm1254, %v760, %v1137
      %v1266 = vsel %vm1254, %v762, %v1141
      %v1267 = vsel %vm1254, %v745, %v1145
      %v1268 = vsel %vm1254, %v759, %v1149
      %v1269 = vsel %vm1254, %v761, %v1153
      %v1270 = vsel %vm1254, %v763, %v1157
      %v1271 = vsel %vm1254, %v787, %v1161
      %v1272 = vsel %vm1254, %v801, %v1165
      %v1273 = vsel %vm1254, %v809, %v1169
      %v1274 = vsel %vm1254, %v811, %v1173
      %v1275 = vsel %vm1254, %v794, %v1177
      %v1276 = vsel %vm1254, %v808, %v1181
      %v1277 = vsel %vm1254, %v810, %v1185
      %v1278 = vsel %vm1254, %v812, %v1189
      %v1279 = vsel %vm1254, %v836, %v1193
      %v1280 = vsel %vm1254, %v850, %v1197
      %v1281 = vsel %vm1254, %v858, %v1201
      %v1282 = vsel %vm1254, %v860, %v1205
      %v1283 = vsel %vm1254, %v843, %v1209
      %v1284 = vsel %vm1254, %v857, %v1213
      %v1285 = vsel %vm1254, %v859, %v1217
      %v1286 = vsel %vm1254, %v861, %v1221
      %v1287 = vld [vmem:[%s242] sm:$0xff]
      %v1288 = vld [vmem:[%s242 + $0x8] sm:$0xff]
      %v1289 = vld [vmem:[%s242 + $0x10] sm:$0xff]
      %v1290 = vld [vmem:[%s242 + $0x18] sm:$0xff]
      %v1291 = vld [vmem:[%s242 + $0x20] sm:$0xff]
      %v1292 = vld [vmem:[%s242 + $0x28] sm:$0xff]
      %v1293 = vld [vmem:[%s242 + $0x30] sm:$0xff]
      %v1294 = vld [vmem:[%s242 + $0x38] sm:$0xff]
      %v1295 = vadd.s32 %v255, 32
      %v1296 = vadd.s32 %v255, 40
      %v1297 = vadd.s32 %v255, 48
      %v1298 = vadd.s32 %v255, 56
      %vm1299 = vcmp.lt.s32.totalorder %v255, 0
      %v1300 = vsub.s32 0, %v255
      %v1301 = vsel %vm1299, %v1300, %v255
      %v1302 = vshrl.u32 %v1301, 4
      %v1303 = vand.u32 %v1301, 15
      %v1304 = vsub.s32 0, %v1303
      %v1305 = vsel %vm1299, %v1304, %v1303
      %vm1306 = vcmp.lt.s32.totalorder %v256, 0
      %v1307 = vsub.s32 0, %v256
      %v1308 = vsel %vm1306, %v1307, %v256
      %v1309 = vshrl.u32 %v1308, 4
      %v1310 = vand.u32 %v1308, 15
      %v1311 = vsub.s32 0, %v1310
      %v1312 = vsel %vm1306, %v1311, %v1310
      %vm1313 = vcmp.lt.s32.totalorder %v257, 0
      %v1314 = vsub.s32 0, %v257
      %v1315 = vsel %vm1313, %v1314, %v257
      %v1316 = vshrl.u32 %v1315, 4
      %v1317 = vand.u32 %v1315, 15
      %v1318 = vsub.s32 0, %v1317
      %v1319 = vsel %vm1313, %v1318, %v1317
      %vm1320 = vcmp.lt.s32.totalorder %v258, 0
      %v1321 = vsub.s32 0, %v258
      %v1322 = vsel %vm1320, %v1321, %v258
      %v1323 = vshrl.u32 %v1322, 4
      %v1324 = vand.u32 %v1322, 15
      %v1325 = vsub.s32 0, %v1324
      %v1326 = vsel %vm1320, %v1325, %v1324
      %vm1327 = vcmp.lt.s32.totalorder %v1295, 0
      %v1328 = vsub.s32 0, %v1295
      %v1329 = vsel %vm1327, %v1328, %v1295
      %v1330 = vshrl.u32 %v1329, 4
      %v1331 = vand.u32 %v1329, 15
      %v1332 = vsub.s32 0, %v1331
      %v1333 = vsel %vm1327, %v1332, %v1331
      %vm1334 = vcmp.lt.s32.totalorder %v1296, 0
      %v1335 = vsub.s32 0, %v1296
      %v1336 = vsel %vm1334, %v1335, %v1296
      %v1337 = vshrl.u32 %v1336, 4
      %v1338 = vand.u32 %v1336, 15
      %v1339 = vsub.s32 0, %v1338
      %v1340 = vsel %vm1334, %v1339, %v1338
      %vm1341 = vcmp.lt.s32.totalorder %v1297, 0
      %v1342 = vsub.s32 0, %v1297
      %v1343 = vsel %vm1341, %v1342, %v1297
      %v1344 = vshrl.u32 %v1343, 4
      %v1345 = vand.u32 %v1343, 15
      %v1346 = vsub.s32 0, %v1345
      %v1347 = vsel %vm1341, %v1346, %v1345
      %vm1348 = vcmp.lt.s32.totalorder %v1298, 0
      %v1349 = vsub.s32 0, %v1298
      %v1350 = vsel %vm1348, %v1349, %v1298
      %v1351 = vshrl.u32 %v1350, 4
      %v1352 = vand.u32 %v1350, 15
      %v1353 = vsub.s32 0, %v1352
      %v1354 = vsel %vm1348, %v1353, %v1352
      %vm1355 = vcmp.ne.s32.totalorder %v1305, 0
      %vm1356 = vcmp.ne.s32.totalorder %v1312, 0
      %vm1357 = vcmp.ne.s32.totalorder %v1319, 0
      %vm1358 = vcmp.ne.s32.totalorder %v1326, 0
      %vm1359 = vcmp.ne.s32.totalorder %v1333, 0
      %vm1360 = vcmp.ne.s32.totalorder %v1340, 0
      %vm1361 = vcmp.ne.s32.totalorder %v1347, 0
      %vm1362 = vcmp.ne.s32.totalorder %v1354, 0
      %vm1363 = vcmp.lt.s32.totalorder %v1305, 0
      %vm1364 = vcmp.lt.s32.totalorder %v1312, 0
      %vm1365 = vcmp.lt.s32.totalorder %v1319, 0
      %vm1366 = vcmp.lt.s32.totalorder %v1326, 0
      %vm1367 = vcmp.lt.s32.totalorder %v1333, 0
      %vm1368 = vcmp.lt.s32.totalorder %v1340, 0
      %vm1369 = vcmp.lt.s32.totalorder %v1347, 0
      %vm1370 = vcmp.lt.s32.totalorder %v1354, 0
      %vm1371 = vmand %vm1363, %vm1355
      %vm1372 = vmand %vm1364, %vm1356
      %vm1373 = vmand %vm1365, %vm1357
      %vm1374 = vmand %vm1366, %vm1358
      %vm1375 = vmand %vm1367, %vm1359
      %vm1376 = vmand %vm1368, %vm1360
      %vm1377 = vmand %vm1369, %vm1361
      %vm1378 = vmand %vm1370, %vm1362
      %v1379 = vadd.s32 %v1305, 16
      %v1380 = vadd.s32 %v1312, 16
      %v1381 = vadd.s32 %v1319, 16
      %v1382 = vadd.s32 %v1326, 16
      %v1383 = vadd.s32 %v1333, 16
      %v1384 = vadd.s32 %v1340, 16
      %v1385 = vadd.s32 %v1347, 16
      %v1386 = vadd.s32 %v1354, 16
      %v1387 = vsel %vm1371, %v1379, %v1305
      %v1388 = vsel %vm1372, %v1380, %v1312
      %v1389 = vsel %vm1373, %v1381, %v1319
      %v1390 = vsel %vm1374, %v1382, %v1326
      %v1391 = vsel %vm1375, %v1383, %v1333
      %v1392 = vsel %vm1376, %v1384, %v1340
      %v1393 = vsel %vm1377, %v1385, %v1347
      %v1394 = vsel %vm1378, %v1386, %v1354
      %vm1395 = vcmp.ne.s32.totalorder %v1387, 0
      %vm1396 = vcmp.ne.s32.totalorder %v1388, 0
      %vm1397 = vcmp.ne.s32.totalorder %v1389, 0
      %vm1398 = vcmp.ne.s32.totalorder %v1390, 0
      %vm1399 = vcmp.ne.s32.totalorder %v1391, 0
      %vm1400 = vcmp.ne.s32.totalorder %v1392, 0
      %vm1401 = vcmp.ne.s32.totalorder %v1393, 0
      %vm1402 = vcmp.ne.s32.totalorder %v1394, 0
      %v1403 = vsel %vm1395, 1.0, 0.0
      %v1404 = vsel %vm1396, 1.0, 0.0
      %v1405 = vsel %vm1397, 1.0, 0.0
      %v1406 = vsel %vm1398, 1.0, 0.0
      %v1407 = vsel %vm1399, 1.0, 0.0
      %v1408 = vsel %vm1400, 1.0, 0.0
      %v1409 = vsel %vm1401, 1.0, 0.0
      %v1410 = vsel %vm1402, 1.0, 0.0
      %vm1411 = vcmp.ne.s32.totalorder %v1387, 15
      %vm1412 = vcmp.ne.s32.totalorder %v1388, 15
      %vm1413 = vcmp.ne.s32.totalorder %v1389, 15
      %vm1414 = vcmp.ne.s32.totalorder %v1390, 15
      %vm1415 = vcmp.ne.s32.totalorder %v1391, 15
      %vm1416 = vcmp.ne.s32.totalorder %v1392, 15
      %vm1417 = vcmp.ne.s32.totalorder %v1393, 15
      %vm1418 = vcmp.ne.s32.totalorder %v1394, 15
      %v1419 = vsel %vm1411, 1.0, 0.0
      %v1420 = vsel %vm1412, 1.0, 0.0
      %v1421 = vsel %vm1413, 1.0, 0.0
      %v1422 = vsel %vm1414, 1.0, 0.0
      %v1423 = vsel %vm1415, 1.0, 0.0
      %v1424 = vsel %vm1416, 1.0, 0.0
      %v1425 = vsel %vm1417, 1.0, 0.0
      %v1426 = vsel %vm1418, 1.0, 0.0
      %v1459 = vcombine.low %v1255, %v1256
      %v1460 = vcombine.low %v1257, %v1258
      %v1462 = vunpack.c.l.s4 1983009808
      %v1463 = vunpack.c.0.s8 %v1462
      %v1464 = vlaneseq
      %v1465 = vshrl.u32 %v1464, 7
      %v1466 = vsub.s32 %v1463, %v1465
      %v1467 = vrot.slane %v1459, %v1466
      %v1469 = vunpack.c.l.s4 1983009808
      %v1470 = vunpack.c.0.s8 %v1469
      %v1471 = vlaneseq
      %v1472 = vshrl.u32 %v1471, 7
      %v1473 = vsub.s32 %v1470, %v1472
      %v1474 = vrot.slane %v1460, %v1473
      %v1475 = vcombine.low %v1467, %v1474
      %v1476 = vcombine.low %v1259, %v1260
      %v1477 = vcombine.low %v1261, %v1262
      %v1479 = vunpack.c.l.s4 1983009808
      %v1480 = vunpack.c.0.s8 %v1479
      %v1481 = vlaneseq
      %v1482 = vshrl.u32 %v1481, 7
      %v1483 = vsub.s32 %v1480, %v1482
      %v1484 = vrot.slane %v1476, %v1483
      %v1486 = vunpack.c.l.s4 1983009808
      %v1487 = vunpack.c.0.s8 %v1486
      %v1488 = vlaneseq
      %v1489 = vshrl.u32 %v1488, 7
      %v1490 = vsub.s32 %v1487, %v1489
      %v1491 = vrot.slane %v1477, %v1490
      %v1492 = vcombine.low %v1484, %v1491
      %v1493 = vcombine.low %v1263, %v1264
      %v1494 = vcombine.low %v1265, %v1266
      %v1496 = vunpack.c.l.s4 1983009808
      %v1497 = vunpack.c.0.s8 %v1496
      %v1498 = vlaneseq
      %v1499 = vshrl.u32 %v1498, 7
      %v1500 = vsub.s32 %v1497, %v1499
      %v1501 = vrot.slane %v1493, %v1500
      %v1503 = vunpack.c.l.s4 1983009808
      %v1504 = vunpack.c.0.s8 %v1503
      %v1505 = vlaneseq
      %v1506 = vshrl.u32 %v1505, 7
      %v1507 = vsub.s32 %v1504, %v1506
      %v1508 = vrot.slane %v1494, %v1507
      %v1509 = vcombine.low %v1501, %v1508
      %v1510 = vcombine.low %v1267, %v1268
      %v1511 = vcombine.low %v1269, %v1270
      %v1513 = vunpack.c.l.s4 1983009808
      %v1514 = vunpack.c.0.s8 %v1513
      %v1515 = vlaneseq
      %v1516 = vshrl.u32 %v1515, 7
      %v1517 = vsub.s32 %v1514, %v1516
      %v1518 = vrot.slane %v1510, %v1517
      %v1520 = vunpack.c.l.s4 1983009808
      %v1521 = vunpack.c.0.s8 %v1520
      %v1522 = vlaneseq
      %v1523 = vshrl.u32 %v1522, 7
      %v1524 = vsub.s32 %v1521, %v1523
      %v1525 = vrot.slane %v1511, %v1524
      %v1526 = vcombine.low %v1518, %v1525
      %v1527 = vcombine.low %v1271, %v1272
      %v1528 = vcombine.low %v1273, %v1274
      %v1530 = vunpack.c.l.s4 1983009808
      %v1531 = vunpack.c.0.s8 %v1530
      %v1532 = vlaneseq
      %v1533 = vshrl.u32 %v1532, 7
      %v1534 = vsub.s32 %v1531, %v1533
      %v1535 = vrot.slane %v1527, %v1534
      %v1537 = vunpack.c.l.s4 1983009808
      %v1538 = vunpack.c.0.s8 %v1537
      %v1539 = vlaneseq
      %v1540 = vshrl.u32 %v1539, 7
      %v1541 = vsub.s32 %v1538, %v1540
      %v1542 = vrot.slane %v1528, %v1541
      %v1543 = vcombine.low %v1535, %v1542
      %v1544 = vcombine.low %v1275, %v1276
      %v1545 = vcombine.low %v1277, %v1278
      %v1547 = vunpack.c.l.s4 1983009808
      %v1548 = vunpack.c.0.s8 %v1547
      %v1549 = vlaneseq
      %v1550 = vshrl.u32 %v1549, 7
      %v1551 = vsub.s32 %v1548, %v1550
      %v1552 = vrot.slane %v1544, %v1551
      %v1554 = vunpack.c.l.s4 1983009808
      %v1555 = vunpack.c.0.s8 %v1554
      %v1556 = vlaneseq
      %v1557 = vshrl.u32 %v1556, 7
      %v1558 = vsub.s32 %v1555, %v1557
      %v1559 = vrot.slane %v1545, %v1558
      %v1560 = vcombine.low %v1552, %v1559
      %v1561 = vcombine.low %v1279, %v1280
      %v1562 = vcombine.low %v1281, %v1282
      %v1564 = vunpack.c.l.s4 1983009808
      %v1565 = vunpack.c.0.s8 %v1564
      %v1566 = vlaneseq
      %v1567 = vshrl.u32 %v1566, 7
      %v1568 = vsub.s32 %v1565, %v1567
      %v1569 = vrot.slane %v1561, %v1568
      %v1571 = vunpack.c.l.s4 1983009808
      %v1572 = vunpack.c.0.s8 %v1571
      %v1573 = vlaneseq
      %v1574 = vshrl.u32 %v1573, 7
      %v1575 = vsub.s32 %v1572, %v1574
      %v1576 = vrot.slane %v1562, %v1575
      %v1577 = vcombine.low %v1569, %v1576
      %v1578 = vcombine.low %v1283, %v1284
      %v1579 = vcombine.low %v1285, %v1286
      %v1581 = vunpack.c.l.s4 1983009808
      %v1582 = vunpack.c.0.s8 %v1581
      %v1583 = vlaneseq
      %v1584 = vshrl.u32 %v1583, 7
      %v1585 = vsub.s32 %v1582, %v1584
      %v1586 = vrot.slane %v1578, %v1585
      %v1588 = vunpack.c.l.s4 1983009808
      %v1589 = vunpack.c.0.s8 %v1588
      %v1590 = vlaneseq
      %v1591 = vshrl.u32 %v1590, 7
      %v1592 = vsub.s32 %v1589, %v1591
      %v1593 = vrot.slane %v1579, %v1592
      %v1594 = vcombine.low %v1586, %v1593
      %v1595 = vrot.slane %v1475, 7
      %v1596 = vrot.slane %v1492, 7
      %v1597 = vsel %vm1254, %v1595, %v1596
      %v1598 = vrot.slane %v1509, 7
      %v1599 = vsel %vm1254, %v1596, %v1598
      %v1600 = vrot.slane %v1526, 7
      %v1601 = vsel %vm1254, %v1598, %v1600
      %v1602 = vrot.slane %v1543, 7
      %v1603 = vsel %vm1254, %v1600, %v1602
      %v1604 = vrot.slane %v1560, 7
      %v1605 = vsel %vm1254, %v1602, %v1604
      %v1606 = vrot.slane %v1577, 7
      %v1607 = vsel %vm1254, %v1604, %v1606
      %v1608 = vrot.slane %v1594, 7
      %v1609 = vsel %vm1254, %v1606, %v1608
      %v1618 = vsel %vm1254, 0.0, %v1595
      %v1619 = vmul.f32 %v1618, %v1403
      %v1620 = vmul.f32 %v1597, %v1404
      %v1621 = vmul.f32 %v1599, %v1405
      %v1622 = vmul.f32 %v1601, %v1406
      %v1623 = vmul.f32 %v1603, %v1407
      %v1624 = vmul.f32 %v1605, %v1408
      %v1625 = vmul.f32 %v1607, %v1409
      %v1626 = vmul.f32 %v1609, %v1410
      %v1627 = vrot.slane %v1475, 1
      %v1628 = vrot.slane %v1492, 1
      %v1629 = vsel %vm319, %v1627, %v1628
      %v1630 = vrot.slane %v1509, 1
      %v1631 = vsel %vm319, %v1628, %v1630
      %v1632 = vrot.slane %v1526, 1
      %v1633 = vsel %vm319, %v1630, %v1632
      %v1634 = vrot.slane %v1543, 1
      %v1635 = vsel %vm319, %v1632, %v1634
      %v1636 = vrot.slane %v1560, 1
      %v1637 = vsel %vm319, %v1634, %v1636
      %v1638 = vrot.slane %v1577, 1
      %v1639 = vsel %vm319, %v1636, %v1638
      %v1640 = vrot.slane %v1594, 1
      %v1641 = vsel %vm319, %v1638, %v1640
      %v1650 = vsel %vm319, %v1640, 0.0
      %v1651 = vmul.f32 %v1629, %v1419
      %v1652 = vmul.f32 %v1631, %v1420
      %v1653 = vmul.f32 %v1633, %v1421
      %v1654 = vmul.f32 %v1635, %v1422
      %v1655 = vmul.f32 %v1637, %v1423
      %v1656 = vmul.f32 %v1639, %v1424
      %v1657 = vmul.f32 %v1641, %v1425
      %v1658 = vmul.f32 %v1650, %v1426
      %v1667 = vrot.slane %v1287, 7
      %v1668 = vrot.slane %v1288, 7
      %v1669 = vsel %vm1254, %v1667, %v1668
      %v1670 = vrot.slane %v1289, 7
      %v1671 = vsel %vm1254, %v1668, %v1670
      %v1672 = vrot.slane %v1290, 7
      %v1673 = vsel %vm1254, %v1670, %v1672
      %v1674 = vrot.slane %v1291, 7
      %v1675 = vsel %vm1254, %v1672, %v1674
      %v1676 = vrot.slane %v1292, 7
      %v1677 = vsel %vm1254, %v1674, %v1676
      %v1678 = vrot.slane %v1293, 7
      %v1679 = vsel %vm1254, %v1676, %v1678
      %v1680 = vrot.slane %v1294, 7
      %v1681 = vsel %vm1254, %v1678, %v1680
      %v1690 = vsel %vm1254, 0.0, %v1667
      %v1691 = vmul.f32 %v1690, %v1403
      %v1692 = vmul.f32 %v1669, %v1404
      %v1693 = vmul.f32 %v1671, %v1405
      %v1694 = vmul.f32 %v1673, %v1406
      %v1695 = vmul.f32 %v1675, %v1407
      %v1696 = vmul.f32 %v1677, %v1408
      %v1697 = vmul.f32 %v1679, %v1409
      %v1698 = vmul.f32 %v1681, %v1410
      %v1699 = vrot.slane %v1287, 1
      %v1700 = vrot.slane %v1288, 1
      %v1701 = vsel %vm319, %v1699, %v1700
      %v1702 = vrot.slane %v1289, 1
      %v1703 = vsel %vm319, %v1700, %v1702
      %v1704 = vrot.slane %v1290, 1
      %v1705 = vsel %vm319, %v1702, %v1704
      %v1706 = vrot.slane %v1291, 1
      %v1707 = vsel %vm319, %v1704, %v1706
      %v1708 = vrot.slane %v1292, 1
      %v1709 = vsel %vm319, %v1706, %v1708
      %v1710 = vrot.slane %v1293, 1
      %v1711 = vsel %vm319, %v1708, %v1710
      %v1712 = vrot.slane %v1294, 1
      %v1713 = vsel %vm319, %v1710, %v1712
      %v1722 = vsel %vm319, %v1712, 0.0
      %v1723 = vmul.f32 %v1701, %v1419
      %v1724 = vmul.f32 %v1703, %v1420
      %v1725 = vmul.f32 %v1705, %v1421
      %v1726 = vmul.f32 %v1707, %v1422
      %v1727 = vmul.f32 %v1709, %v1423
      %v1728 = vmul.f32 %v1711, %v1424
      %v1729 = vmul.f32 %v1713, %v1425
      %v1730 = vmul.f32 %v1722, %v1426
      %s1731 = scalar_lea.vmem %s3, 128
      %v1732 = vld [vmem:[%s1731] sm:$0xff]
      %v1733 = vld [vmem:[%s1731 + $0x8] sm:$0xff]
      %v1734 = vld [vmem:[%s1731 + $0x10] sm:$0xff]
      %v1735 = vld [vmem:[%s1731 + $0x18] sm:$0xff]
      %v1736 = vld [vmem:[%s1731 + $0x20] sm:$0xff]
      %v1737 = vld [vmem:[%s1731 + $0x28] sm:$0xff]
      %v1738 = vld [vmem:[%s1731 + $0x30] sm:$0xff]
      %v1739 = vld [vmem:[%s1731 + $0x38] sm:$0xff]
      %v1740 = vld [vmem:[%s1731 + $0x40] sm:$0xff]
      %v1741 = vld [vmem:[%s1731 + $0x48] sm:$0xff]
      %v1742 = vld [vmem:[%s1731 + $0x50] sm:$0xff]
      %v1743 = vld [vmem:[%s1731 + $0x58] sm:$0xff]
      %v1744 = vld [vmem:[%s1731 + $0x60] sm:$0xff]
      %v1745 = vld [vmem:[%s1731 + $0x68] sm:$0xff]
      %v1746 = vld [vmem:[%s1731 + $0x70] sm:$0xff]
      %v1747 = vld [vmem:[%s1731 + $0x78] sm:$0xff]
      %v1748 = vld [vmem:[%s3] sm:$0xff]
      %v1749 = vld [vmem:[%s3 + $0x8] sm:$0xff]
      %v1750 = vld [vmem:[%s3 + $0x10] sm:$0xff]
      %v1751 = vld [vmem:[%s3 + $0x18] sm:$0xff]
      %v1752 = vld [vmem:[%s3 + $0x20] sm:$0xff]
      %v1753 = vld [vmem:[%s3 + $0x28] sm:$0xff]
      %v1754 = vld [vmem:[%s3 + $0x30] sm:$0xff]
      %v1755 = vld [vmem:[%s3 + $0x38] sm:$0xff]
      %v1756 = vld [vmem:[%s3 + $0x40] sm:$0xff]
      %v1757 = vld [vmem:[%s3 + $0x48] sm:$0xff]
      %v1758 = vld [vmem:[%s3 + $0x50] sm:$0xff]
      %v1759 = vld [vmem:[%s3 + $0x58] sm:$0xff]
      %v1760 = vld [vmem:[%s3 + $0x60] sm:$0xff]
      %v1761 = vld [vmem:[%s3 + $0x68] sm:$0xff]
      %v1762 = vld [vmem:[%s3 + $0x70] sm:$0xff]
      %v1763 = vld [vmem:[%s3 + $0x78] sm:$0xff]
      %1764 = vmatprep.subr.mxu0 0.0
      %1765 = vmatpush1.msra.mxu0 %v1748
      %1766 = vmatprep.subr.mxu0 0.0
      %1767 = vmatpush1.msra.mxu0 %v1749
      %1768 = vmatprep.subr.mxu0 0.0
      %1769 = vmatpush1.msra.mxu0 %v1750
      %1770 = vmatprep.subr.mxu0 0.0
      %1771 = vmatpush1.msra.mxu0 %v1751
      %1772 = vmatprep.subr.mxu0 0.0
      %1773 = vmatpush1.msra.mxu0 %v1752
      %1774 = vmatprep.subr.mxu0 0.0
      %1775 = vmatpush1.msra.mxu0 %v1753
      %1776 = vmatprep.subr.mxu0 0.0
      %1777 = vmatpush1.msra.mxu0 %v1754
      %1778 = vmatprep.subr.mxu0 0.0
      %1779 = vmatpush1.msra.mxu0 %v1755
      %1780 = vmatprep.subr.mxu0 0.0
      %1781 = vmatpush1.msra.mxu0 %v1756
      %1782 = vmatprep.subr.mxu0 0.0
      %1783 = vmatpush1.msra.mxu0 %v1757
      %1784 = vmatprep.subr.mxu0 0.0
      %1785 = vmatpush1.msra.mxu0 %v1758
      %1786 = vmatprep.subr.mxu0 0.0
      %1787 = vmatpush1.msra.mxu0 %v1759
      %1788 = vmatprep.subr.mxu0 0.0
      %1789 = vmatpush1.msra.mxu0 %v1760
      %1790 = vmatprep.subr.mxu0 0.0
      %1791 = vmatpush1.msra.mxu0 %v1761
      %1792 = vmatprep.subr.mxu0 0.0
      %1793 = vmatpush1.msra.mxu0 %v1762
      %1794 = vmatprep.subr.mxu0 0.0
      %1795 = vmatpush1.msra.mxu0 %v1763
      %1796 = vmatprep.subr.mxu0 0.0
      %1797 = vmatpush1.msra.mxu0 0.0
      %1798 = vmatprep.subr.mxu0 0.0
      %1799 = vmatpush1.msra.mxu0 0.0
      %1800 = vmatprep.subr.mxu0 0.0
      %1801 = vmatpush1.msra.mxu0 0.0
      %1802 = vmatprep.subr.mxu0 0.0
      %1803 = vmatpush1.msra.mxu0 0.0
      %1804 = vmatprep.subr.mxu0 0.0
      %1805 = vmatpush1.msra.mxu0 0.0
      %1806 = vmatprep.subr.mxu0 0.0
      %1807 = vmatpush1.msra.mxu0 0.0
      %1808 = vmatprep.subr.mxu0 0.0
      %1809 = vmatpush1.msra.mxu0 0.0
      %1810 = vmatprep.subr.mxu0 0.0
      %1811 = vmatpush1.msra.mxu0 0.0
      %1812 = vmatprep.subr.mxu0 0.0
      %1813 = vmatpush1.msra.mxu0 0.0
      %1814 = vmatprep.subr.mxu0 0.0
      %1815 = vmatpush1.msra.mxu0 0.0
      %1816 = vmatprep.subr.mxu0 0.0
      %1817 = vmatpush1.msra.mxu0 0.0
      %1818 = vmatprep.subr.mxu0 0.0
      %1819 = vmatpush1.msra.mxu0 0.0
      %1820 = vmatprep.subr.mxu0 0.0
      %1821 = vmatpush1.msra.mxu0 0.0
      %1822 = vmatprep.subr.mxu0 0.0
      %1823 = vmatpush1.msra.mxu0 0.0
      %1824 = vmatprep.subr.mxu0 0.0
      %1825 = vmatpush1.msra.mxu0 0.0
      %1826 = vmatprep.subr.mxu0 0.0
      %1827 = vmatpush1.msra.mxu0 0.0
      %1828 = vmatprep.mubr.f32.mxu0 0.0
      %1829 = vmatmul.mubr.f32.gmra.mrb[0].mxu0 %v1619
      %v1830 = vpop.f32.mrb[0].mxu0
      %v1831 = vadd.f32 0.0, %v1830
      %v1832 = vpop.f32.mrb[0].mxu0
      %1833 = vmatprep.mubr.f32.mxu0 0.0
      %1834 = vmatmul.mubr.f32.gmra.mrb[0].mxu0 %v1620
      %v1835 = vpop.f32.mrb[0].mxu0
      %v1836 = vadd.f32 0.0, %v1835
      %v1837 = vpop.f32.mrb[0].mxu0
      %1838 = vmatprep.mubr.f32.mxu0 0.0
      %1839 = vmatmul.mubr.f32.gmra.mrb[0].mxu0 %v1621
      %v1840 = vpop.f32.mrb[0].mxu0
      %v1841 = vadd.f32 0.0, %v1840
      %v1842 = vpop.f32.mrb[0].mxu0
      %1843 = vmatprep.mubr.f32.mxu0 0.0
      %1844 = vmatmul.mubr.f32.gmra.mrb[0].mxu0 %v1622
      %v1845 = vpop.f32.mrb[0].mxu0
      %v1846 = vadd.f32 0.0, %v1845
      %v1847 = vpop.f32.mrb[0].mxu0
      %1848 = vmatprep.mubr.f32.mxu0 0.0
      %1849 = vmatmul.mubr.f32.gmra.mrb[0].mxu0 %v1623
      %v1850 = vpop.f32.mrb[0].mxu0
      %v1851 = vadd.f32 0.0, %v1850
      %v1852 = vpop.f32.mrb[0].mxu0
      %1853 = vmatprep.mubr.f32.mxu0 0.0
      %1854 = vmatmul.mubr.f32.gmra.mrb[0].mxu0 %v1624
      %v1855 = vpop.f32.mrb[0].mxu0
      %v1856 = vadd.f32 0.0, %v1855
      %v1857 = vpop.f32.mrb[0].mxu0
      %1858 = vmatprep.mubr.f32.mxu0 0.0
      %1859 = vmatmul.mubr.f32.gmra.mrb[0].mxu0 %v1625
      %v1860 = vpop.f32.mrb[0].mxu0
      %v1861 = vadd.f32 0.0, %v1860
      %v1862 = vpop.f32.mrb[0].mxu0
      %1863 = vmatprep.mubr.f32.mxu0 0.0
      %1864 = vmatmul.mubr.f32.gmra.mrb[0].mxu0 %v1626
      %v1865 = vpop.f32.mrb[0].mxu0
      %v1866 = vadd.f32 0.0, %v1865
      %v1867 = vpop.f32.mrb[0].mxu0
      %1868 = vdwg.mxu0
      %1877 = vmatprep.subr.mxu0 0.0
      %1878 = vmatpush1.msra.mxu0 %v1732
      %1879 = vmatprep.subr.mxu0 0.0
      %1880 = vmatpush1.msra.mxu0 %v1733
      %1881 = vmatprep.subr.mxu0 0.0
      %1882 = vmatpush1.msra.mxu0 %v1734
      %1883 = vmatprep.subr.mxu0 0.0
      %1884 = vmatpush1.msra.mxu0 %v1735
      %1885 = vmatprep.subr.mxu0 0.0
      %1886 = vmatpush1.msra.mxu0 %v1736
      %1887 = vmatprep.subr.mxu0 0.0
      %1888 = vmatpush1.msra.mxu0 %v1737
      %1889 = vmatprep.subr.mxu0 0.0
      %1890 = vmatpush1.msra.mxu0 %v1738
      %1891 = vmatprep.subr.mxu0 0.0
      %1892 = vmatpush1.msra.mxu0 %v1739
      %1893 = vmatprep.subr.mxu0 0.0
      %1894 = vmatpush1.msra.mxu0 %v1740
      %1895 = vmatprep.subr.mxu0 0.0
      %1896 = vmatpush1.msra.mxu0 %v1741
      %1897 = vmatprep.subr.mxu0 0.0
      %1898 = vmatpush1.msra.mxu0 %v1742
      %1899 = vmatprep.subr.mxu0 0.0
      %1900 = vmatpush1.msra.mxu0 %v1743
      %1901 = vmatprep.subr.mxu0 0.0
      %1902 = vmatpush1.msra.mxu0 %v1744
      %1903 = vmatprep.subr.mxu0 0.0
      %1904 = vmatpush1.msra.mxu0 %v1745
      %1905 = vmatprep.subr.mxu0 0.0
      %1906 = vmatpush1.msra.mxu0 %v1746
      %1907 = vmatprep.subr.mxu0 0.0
      %1908 = vmatpush1.msra.mxu0 %v1747
      %1909 = vmatprep.subr.mxu0 0.0
      %1910 = vmatpush1.msra.mxu0 0.0
      %1911 = vmatprep.subr.mxu0 0.0
      %1912 = vmatpush1.msra.mxu0 0.0
      %1913 = vmatprep.subr.mxu0 0.0
      %1914 = vmatpush1.msra.mxu0 0.0
      %1915 = vmatprep.subr.mxu0 0.0
      %1916 = vmatpush1.msra.mxu0 0.0
      %1917 = vmatprep.subr.mxu0 0.0
      %1918 = vmatpush1.msra.mxu0 0.0
      %1919 = vmatprep.subr.mxu0 0.0
      %1920 = vmatpush1.msra.mxu0 0.0
      %1921 = vmatprep.subr.mxu0 0.0
      %1922 = vmatpush1.msra.mxu0 0.0
      %1923 = vmatprep.subr.mxu0 0.0
      %1924 = vmatpush1.msra.mxu0 0.0
      %1925 = vmatprep.subr.mxu0 0.0
      %1926 = vmatpush1.msra.mxu0 0.0
      %1927 = vmatprep.subr.mxu0 0.0
      %1928 = vmatpush1.msra.mxu0 0.0
      %1929 = vmatprep.subr.mxu0 0.0
      %1930 = vmatpush1.msra.mxu0 0.0
      %1931 = vmatprep.subr.mxu0 0.0
      %1932 = vmatpush1.msra.mxu0 0.0
      %1933 = vmatprep.subr.mxu0 0.0
      %1934 = vmatpush1.msra.mxu0 0.0
      %1935 = vmatprep.subr.mxu0 0.0
      %1936 = vmatpush1.msra.mxu0 0.0
      %1937 = vmatprep.subr.mxu0 0.0
      %1938 = vmatpush1.msra.mxu0 0.0
      %1939 = vmatprep.subr.mxu0 0.0
      %1940 = vmatpush1.msra.mxu0 0.0
      %1941 = vmatprep.mubr.f32.mxu0 0.0
      %1942 = vmatmul.mubr.f32.gmra.mrb[0].mxu0 %v1475
      %v1943 = vpop.f32.mrb[0].mxu0
      %v1944 = vadd.f32 %v1831, %v1943
      %v1945 = vpop.f32.mrb[0].mxu0
      %1946 = vmatprep.mubr.f32.mxu0 0.0
      %1947 = vmatmul.mubr.f32.gmra.mrb[0].mxu0 %v1492
      %v1948 = vpop.f32.mrb[0].mxu0
      %v1949 = vadd.f32 %v1836, %v1948
      %v1950 = vpop.f32.mrb[0].mxu0
      %1951 = vmatprep.mubr.f32.mxu0 0.0
      %1952 = vmatmul.mubr.f32.gmra.mrb[0].mxu0 %v1509
      %v1953 = vpop.f32.mrb[0].mxu0
      %v1954 = vadd.f32 %v1841, %v1953
      %v1955 = vpop.f32.mrb[0].mxu0
      %1956 = vmatprep.mubr.f32.mxu0 0.0
      %1957 = vmatmul.mubr.f32.gmra.mrb[0].mxu0 %v1526
      %v1958 = vpop.f32.mrb[0].mxu0
      %v1959 = vadd.f32 %v1846, %v1958
      %v1960 = vpop.f32.mrb[0].mxu0
      %1961 = vmatprep.mubr.f32.mxu0 0.0
      %1962 = vmatmul.mubr.f32.gmra.mrb[0].mxu0 %v1543
      %v1963 = vpop.f32.mrb[0].mxu0
      %v1964 = vadd.f32 %v1851, %v1963
      %v1965 = vpop.f32.mrb[0].mxu0
      %1966 = vmatprep.mubr.f32.mxu0 0.0
      %1967 = vmatmul.mubr.f32.gmra.mrb[0].mxu0 %v1560
      %v1968 = vpop.f32.mrb[0].mxu0
      %v1969 = vadd.f32 %v1856, %v1968
      %v1970 = vpop.f32.mrb[0].mxu0
      %1971 = vmatprep.mubr.f32.mxu0 0.0
      %1972 = vmatmul.mubr.f32.gmra.mrb[0].mxu0 %v1577
      %v1973 = vpop.f32.mrb[0].mxu0
      %v1974 = vadd.f32 %v1861, %v1973
      %v1975 = vpop.f32.mrb[0].mxu0
      %1976 = vmatprep.mubr.f32.mxu0 0.0
      %1977 = vmatmul.mubr.f32.gmra.mrb[0].mxu0 %v1594
      %v1978 = vpop.f32.mrb[0].mxu0
      %v1979 = vadd.f32 %v1866, %v1978
      %v1980 = vpop.f32.mrb[0].mxu0
      %1981 = vdwg.mxu0
      %s1982 = scalar_lea.vmem %s3, 256
      %v1983 = vld [vmem:[%s1982] sm:$0xff]
      %v1984 = vld [vmem:[%s1982 + $0x8] sm:$0xff]
      %v1985 = vld [vmem:[%s1982 + $0x10] sm:$0xff]
      %v1986 = vld [vmem:[%s1982 + $0x18] sm:$0xff]
      %v1987 = vld [vmem:[%s1982 + $0x20] sm:$0xff]
      %v1988 = vld [vmem:[%s1982 + $0x28] sm:$0xff]
      %v1989 = vld [vmem:[%s1982 + $0x30] sm:$0xff]
      %v1990 = vld [vmem:[%s1982 + $0x38] sm:$0xff]
      %v1991 = vld [vmem:[%s1982 + $0x40] sm:$0xff]
      %v1992 = vld [vmem:[%s1982 + $0x48] sm:$0xff]
      %v1993 = vld [vmem:[%s1982 + $0x50] sm:$0xff]
      %v1994 = vld [vmem:[%s1982 + $0x58] sm:$0xff]
      %v1995 = vld [vmem:[%s1982 + $0x60] sm:$0xff]
      %v1996 = vld [vmem:[%s1982 + $0x68] sm:$0xff]
      %v1997 = vld [vmem:[%s1982 + $0x70] sm:$0xff]
      %v1998 = vld [vmem:[%s1982 + $0x78] sm:$0xff]
      %1999 = vmatprep.subr.mxu0 0.0
      %2000 = vmatpush1.msra.mxu0 %v1983
      %2001 = vmatprep.subr.mxu0 0.0
      %2002 = vmatpush1.msra.mxu0 %v1984
      %2003 = vmatprep.subr.mxu0 0.0
      %2004 = vmatpush1.msra.mxu0 %v1985
      %2005 = vmatprep.subr.mxu0 0.0
      %2006 = vmatpush1.msra.mxu0 %v1986
      %2007 = vmatprep.subr.mxu0 0.0
      %2008 = vmatpush1.msra.mxu0 %v1987
      %2009 = vmatprep.subr.mxu0 0.0
      %2010 = vmatpush1.msra.mxu0 %v1988
      %2011 = vmatprep.subr.mxu0 0.0
      %2012 = vmatpush1.msra.mxu0 %v1989
      %2013 = vmatprep.subr.mxu0 0.0
      %2014 = vmatpush1.msra.mxu0 %v1990
      %2015 = vmatprep.subr.mxu0 0.0
      %2016 = vmatpush1.msra.mxu0 %v1991
      %2017 = vmatprep.subr.mxu0 0.0
      %2018 = vmatpush1.msra.mxu0 %v1992
      %2019 = vmatprep.subr.mxu0 0.0
      %2020 = vmatpush1.msra.mxu0 %v1993
      %2021 = vmatprep.subr.mxu0 0.0
      %2022 = vmatpush1.msra.mxu0 %v1994
      %2023 = vmatprep.subr.mxu0 0.0
      %2024 = vmatpush1.msra.mxu0 %v1995
      %2025 = vmatprep.subr.mxu0 0.0
      %2026 = vmatpush1.msra.mxu0 %v1996
      %2027 = vmatprep.subr.mxu0 0.0
      %2028 = vmatpush1.msra.mxu0 %v1997
      %2029 = vmatprep.subr.mxu0 0.0
      %2030 = vmatpush1.msra.mxu0 %v1998
      %2031 = vmatprep.subr.mxu0 0.0
      %2032 = vmatpush1.msra.mxu0 0.0
      %2033 = vmatprep.subr.mxu0 0.0
      %2034 = vmatpush1.msra.mxu0 0.0
      %2035 = vmatprep.subr.mxu0 0.0
      %2036 = vmatpush1.msra.mxu0 0.0
      %2037 = vmatprep.subr.mxu0 0.0
      %2038 = vmatpush1.msra.mxu0 0.0
      %2039 = vmatprep.subr.mxu0 0.0
      %2040 = vmatpush1.msra.mxu0 0.0
      %2041 = vmatprep.subr.mxu0 0.0
      %2042 = vmatpush1.msra.mxu0 0.0
      %2043 = vmatprep.subr.mxu0 0.0
      %2044 = vmatpush1.msra.mxu0 0.0
      %2045 = vmatprep.subr.mxu0 0.0
      %2046 = vmatpush1.msra.mxu0 0.0
      %2047 = vmatprep.subr.mxu0 0.0
      %2048 = vmatpush1.msra.mxu0 0.0
      %2049 = vmatprep.subr.mxu0 0.0
      %2050 = vmatpush1.msra.mxu0 0.0
      %2051 = vmatprep.subr.mxu0 0.0
      %2052 = vmatpush1.msra.mxu0 0.0
      %2053 = vmatprep.subr.mxu0 0.0
      %2054 = vmatpush1.msra.mxu0 0.0
      %2055 = vmatprep.subr.mxu0 0.0
      %2056 = vmatpush1.msra.mxu0 0.0
      %2057 = vmatprep.subr.mxu0 0.0
      %2058 = vmatpush1.msra.mxu0 0.0
      %2059 = vmatprep.subr.mxu0 0.0
      %2060 = vmatpush1.msra.mxu0 0.0
      %2061 = vmatprep.subr.mxu0 0.0
      %2062 = vmatpush1.msra.mxu0 0.0
      %2063 = vmatprep.mubr.f32.mxu0 0.0
      %2064 = vmatmul.mubr.f32.gmra.mrb[0].mxu0 %v1651
      %v2065 = vpop.f32.mrb[0].mxu0
      %v2066 = vadd.f32 0.0, %v2065
      %v2067 = vpop.f32.mrb[0].mxu0
      %2068 = vmatprep.mubr.f32.mxu0 0.0
      %2069 = vmatmul.mubr.f32.gmra.mrb[0].mxu0 %v1652
      %v2070 = vpop.f32.mrb[0].mxu0
      %v2071 = vadd.f32 0.0, %v2070
      %v2072 = vpop.f32.mrb[0].mxu0
      %2073 = vmatprep.mubr.f32.mxu0 0.0
      %2074 = vmatmul.mubr.f32.gmra.mrb[0].mxu0 %v1653
      %v2075 = vpop.f32.mrb[0].mxu0
      %v2076 = vadd.f32 0.0, %v2075
      %v2077 = vpop.f32.mrb[0].mxu0
      %2078 = vmatprep.mubr.f32.mxu0 0.0
      %2079 = vmatmul.mubr.f32.gmra.mrb[0].mxu0 %v1654
      %v2080 = vpop.f32.mrb[0].mxu0
      %v2081 = vadd.f32 0.0, %v2080
      %v2082 = vpop.f32.mrb[0].mxu0
      %2083 = vmatprep.mubr.f32.mxu0 0.0
      %2084 = vmatmul.mubr.f32.gmra.mrb[0].mxu0 %v1655
      %v2085 = vpop.f32.mrb[0].mxu0
      %v2086 = vadd.f32 0.0, %v2085
      %v2087 = vpop.f32.mrb[0].mxu0
      %2088 = vmatprep.mubr.f32.mxu0 0.0
      %2089 = vmatmul.mubr.f32.gmra.mrb[0].mxu0 %v1656
      %v2090 = vpop.f32.mrb[0].mxu0
      %v2091 = vadd.f32 0.0, %v2090
      %v2092 = vpop.f32.mrb[0].mxu0
      %2093 = vmatprep.mubr.f32.mxu0 0.0
      %2094 = vmatmul.mubr.f32.gmra.mrb[0].mxu0 %v1657
      %v2095 = vpop.f32.mrb[0].mxu0
      %v2096 = vadd.f32 0.0, %v2095
      %v2097 = vpop.f32.mrb[0].mxu0
      %2098 = vmatprep.mubr.f32.mxu0 0.0
      %2099 = vmatmul.mubr.f32.gmra.mrb[0].mxu0 %v1658
      %v2100 = vpop.f32.mrb[0].mxu0
      %v2101 = vadd.f32 0.0, %v2100
      %v2102 = vpop.f32.mrb[0].mxu0
      %2103 = vdwg.mxu0
      %v2104 = vadd.f32 %v1944, %v2066
      %v2105 = vadd.f32 %v1949, %v2071
      %v2106 = vadd.f32 %v1954, %v2076
      %v2107 = vadd.f32 %v1959, %v2081
      %v2108 = vadd.f32 %v1964, %v2086
      %v2109 = vadd.f32 %v1969, %v2091
      %v2110 = vadd.f32 %v1974, %v2096
      %v2111 = vadd.f32 %v1979, %v2101
      %s2112 = scalar_lea.vmem %s4, 64
      %v2113 = vld [vmem:[%s2112] sm:$0xff]
      %v2114 = vld [vmem:[%s2112 + $0x8] sm:$0xff]
      %v2115 = vld [vmem:[%s2112 + $0x10] sm:$0xff]
      %v2116 = vld [vmem:[%s2112 + $0x18] sm:$0xff]
      %v2117 = vld [vmem:[%s2112 + $0x20] sm:$0xff]
      %v2118 = vld [vmem:[%s2112 + $0x28] sm:$0xff]
      %v2119 = vld [vmem:[%s2112 + $0x30] sm:$0xff]
      %v2120 = vld [vmem:[%s2112 + $0x38] sm:$0xff]
      %v2121 = vsel %vm344, %v1287, 0
      %v2123 = vsel %vm344, %v1288, 0
      %v2125 = vsel %vm344, %v1289, 0
      %v2127 = vsel %vm344, %v1290, 0
      %v2129 = vsel %vm344, %v1291, 0
      %v2131 = vsel %vm344, %v1292, 0
      %v2133 = vsel %vm344, %v1293, 0
      %v2135 = vsel %vm344, %v1294, 0
      %2137 = vmatprep.subr.mxu0 0.0
      %2138 = vmatpush1.msra.mxu0 %v2113
      %2139 = vmatprep.subr.mxu0 0.0
      %2140 = vmatpush1.msra.mxu0 %v2114
      %2141 = vmatprep.subr.mxu0 0.0
      %2142 = vmatpush1.msra.mxu0 %v2115
      %2143 = vmatprep.subr.mxu0 0.0
      %2144 = vmatpush1.msra.mxu0 %v2116
      %2145 = vmatprep.subr.mxu0 0.0
      %2146 = vmatpush1.msra.mxu0 %v2117
      %2147 = vmatprep.subr.mxu0 0.0
      %2148 = vmatpush1.msra.mxu0 %v2118
      %2149 = vmatprep.subr.mxu0 0.0
      %2150 = vmatpush1.msra.mxu0 %v2119
      %2151 = vmatprep.subr.mxu0 0.0
      %2152 = vmatpush1.msra.mxu0 %v2120
      %2153 = vmatprep.subr.mxu0 0.0
      %2154 = vmatpush1.msra.mxu0 0.0
      %2155 = vmatprep.subr.mxu0 0.0
      %2156 = vmatpush1.msra.mxu0 0.0
      %2157 = vmatprep.subr.mxu0 0.0
      %2158 = vmatpush1.msra.mxu0 0.0
      %2159 = vmatprep.subr.mxu0 0.0
      %2160 = vmatpush1.msra.mxu0 0.0
      %2161 = vmatprep.subr.mxu0 0.0
      %2162 = vmatpush1.msra.mxu0 0.0
      %2163 = vmatprep.subr.mxu0 0.0
      %2164 = vmatpush1.msra.mxu0 0.0
      %2165 = vmatprep.subr.mxu0 0.0
      %2166 = vmatpush1.msra.mxu0 0.0
      %2167 = vmatprep.subr.mxu0 0.0
      %2168 = vmatpush1.msra.mxu0 0.0
      %2169 = vmatprep.subr.mxu0 0.0
      %2170 = vmatpush1.msra.mxu0 0.0
      %2171 = vmatprep.subr.mxu0 0.0
      %2172 = vmatpush1.msra.mxu0 0.0
      %2173 = vmatprep.subr.mxu0 0.0
      %2174 = vmatpush1.msra.mxu0 0.0
      %2175 = vmatprep.subr.mxu0 0.0
      %2176 = vmatpush1.msra.mxu0 0.0
      %2177 = vmatprep.subr.mxu0 0.0
      %2178 = vmatpush1.msra.mxu0 0.0
      %2179 = vmatprep.subr.mxu0 0.0
      %2180 = vmatpush1.msra.mxu0 0.0
      %2181 = vmatprep.subr.mxu0 0.0
      %2182 = vmatpush1.msra.mxu0 0.0
      %2183 = vmatprep.subr.mxu0 0.0
      %2184 = vmatpush1.msra.mxu0 0.0
      %2185 = vmatprep.subr.mxu0 0.0
      %2186 = vmatpush1.msra.mxu0 0.0
      %2187 = vmatprep.subr.mxu0 0.0
      %2188 = vmatpush1.msra.mxu0 0.0
      %2189 = vmatprep.subr.mxu0 0.0
      %2190 = vmatpush1.msra.mxu0 0.0
      %2191 = vmatprep.subr.mxu0 0.0
      %2192 = vmatpush1.msra.mxu0 0.0
      %2193 = vmatprep.subr.mxu0 0.0
      %2194 = vmatpush1.msra.mxu0 0.0
      %2195 = vmatprep.subr.mxu0 0.0
      %2196 = vmatpush1.msra.mxu0 0.0
      %2197 = vmatprep.subr.mxu0 0.0
      %2198 = vmatpush1.msra.mxu0 0.0
      %2199 = vmatprep.subr.mxu0 0.0
      %2200 = vmatpush1.msra.mxu0 0.0
      %2201 = vmatprep.mubr.f32.mxu0 0.0
      %2202 = vmatmul.mubr.f32.gmra.mrb[0].mxu0 %v2121
      %v2203 = vpop.f32.mrb[0].mxu0
      %v2204 = vadd.f32 0.0, %v2203
      %v2205 = vpop.f32.mrb[0].mxu0
      %2206 = vmatprep.mubr.f32.mxu0 0.0
      %2207 = vmatmul.mubr.f32.gmra.mrb[0].mxu0 %v2123
      %v2208 = vpop.f32.mrb[0].mxu0
      %v2209 = vadd.f32 0.0, %v2208
      %v2210 = vpop.f32.mrb[0].mxu0
      %2211 = vmatprep.mubr.f32.mxu0 0.0
      %2212 = vmatmul.mubr.f32.gmra.mrb[0].mxu0 %v2125
      %v2213 = vpop.f32.mrb[0].mxu0
      %v2214 = vadd.f32 0.0, %v2213
      %v2215 = vpop.f32.mrb[0].mxu0
      %2216 = vmatprep.mubr.f32.mxu0 0.0
      %2217 = vmatmul.mubr.f32.gmra.mrb[0].mxu0 %v2127
      %v2218 = vpop.f32.mrb[0].mxu0
      %v2219 = vadd.f32 0.0, %v2218
      %v2220 = vpop.f32.mrb[0].mxu0
      %2221 = vmatprep.mubr.f32.mxu0 0.0
      %2222 = vmatmul.mubr.f32.gmra.mrb[0].mxu0 %v2129
      %v2223 = vpop.f32.mrb[0].mxu0
      %v2224 = vadd.f32 0.0, %v2223
      %v2225 = vpop.f32.mrb[0].mxu0
      %2226 = vmatprep.mubr.f32.mxu0 0.0
      %2227 = vmatmul.mubr.f32.gmra.mrb[0].mxu0 %v2131
      %v2228 = vpop.f32.mrb[0].mxu0
      %v2229 = vadd.f32 0.0, %v2228
      %v2230 = vpop.f32.mrb[0].mxu0
      %2231 = vmatprep.mubr.f32.mxu0 0.0
      %2232 = vmatmul.mubr.f32.gmra.mrb[0].mxu0 %v2133
      %v2233 = vpop.f32.mrb[0].mxu0
      %v2234 = vadd.f32 0.0, %v2233
      %v2235 = vpop.f32.mrb[0].mxu0
      %2236 = vmatprep.mubr.f32.mxu0 0.0
      %2237 = vmatmul.mubr.f32.gmra.mrb[0].mxu0 %v2135
      %v2238 = vpop.f32.mrb[0].mxu0
      %v2239 = vadd.f32 0.0, %v2238
      %v2240 = vpop.f32.mrb[0].mxu0
      %2241 = vdwg.mxu0
      %v2242 = vadd.f32 %v2104, %v2204
      %v2243 = vadd.f32 %v2105, %v2209
      %v2244 = vadd.f32 %v2106, %v2214
      %v2245 = vadd.f32 %v2107, %v2219
      %v2246 = vadd.f32 %v2108, %v2224
      %v2247 = vadd.f32 %v2109, %v2229
      %v2248 = vadd.f32 %v2110, %v2234
      %v2249 = vadd.f32 %v2111, %v2239
      %v2250 = vld [vmem:[%s4] sm:$0xff]
      %v2251 = vld [vmem:[%s4 + $0x8] sm:$0xff]
      %v2252 = vld [vmem:[%s4 + $0x10] sm:$0xff]
      %v2253 = vld [vmem:[%s4 + $0x18] sm:$0xff]
      %v2254 = vld [vmem:[%s4 + $0x20] sm:$0xff]
      %v2255 = vld [vmem:[%s4 + $0x28] sm:$0xff]
      %v2256 = vld [vmem:[%s4 + $0x30] sm:$0xff]
      %v2257 = vld [vmem:[%s4 + $0x38] sm:$0xff]
      %v2259 = vsel %vm344, %v1691, 0
      %v2262 = vsel %vm344, %v1692, 0
      %v2265 = vsel %vm344, %v1693, 0
      %v2268 = vsel %vm344, %v1694, 0
      %v2271 = vsel %vm344, %v1695, 0
      %v2274 = vsel %vm344, %v1696, 0
      %v2277 = vsel %vm344, %v1697, 0
      %v2280 = vsel %vm344, %v1698, 0
      %2282 = vmatprep.subr.mxu0 0.0
      %2283 = vmatpush1.msra.mxu0 %v2250
      %2284 = vmatprep.subr.mxu0 0.0
      %2285 = vmatpush1.msra.mxu0 %v2251
      %2286 = vmatprep.subr.mxu0 0.0
      %2287 = vmatpush1.msra.mxu0 %v2252
      %2288 = vmatprep.subr.mxu0 0.0
      %2289 = vmatpush1.msra.mxu0 %v2253
      %2290 = vmatprep.subr.mxu0 0.0
      %2291 = vmatpush1.msra.mxu0 %v2254
      %2292 = vmatprep.subr.mxu0 0.0
      %2293 = vmatpush1.msra.mxu0 %v2255
      %2294 = vmatprep.subr.mxu0 0.0
      %2295 = vmatpush1.msra.mxu0 %v2256
      %2296 = vmatprep.subr.mxu0 0.0
      %2297 = vmatpush1.msra.mxu0 %v2257
      %2298 = vmatprep.subr.mxu0 0.0
      %2299 = vmatpush1.msra.mxu0 0.0
      %2300 = vmatprep.subr.mxu0 0.0
      %2301 = vmatpush1.msra.mxu0 0.0
      %2302 = vmatprep.subr.mxu0 0.0
      %2303 = vmatpush1.msra.mxu0 0.0
      %2304 = vmatprep.subr.mxu0 0.0
      %2305 = vmatpush1.msra.mxu0 0.0
      %2306 = vmatprep.subr.mxu0 0.0
      %2307 = vmatpush1.msra.mxu0 0.0
      %2308 = vmatprep.subr.mxu0 0.0
      %2309 = vmatpush1.msra.mxu0 0.0
      %2310 = vmatprep.subr.mxu0 0.0
      %2311 = vmatpush1.msra.mxu0 0.0
      %2312 = vmatprep.subr.mxu0 0.0
      %2313 = vmatpush1.msra.mxu0 0.0
      %2314 = vmatprep.subr.mxu0 0.0
      %2315 = vmatpush1.msra.mxu0 0.0
      %2316 = vmatprep.subr.mxu0 0.0
      %2317 = vmatpush1.msra.mxu0 0.0
      %2318 = vmatprep.subr.mxu0 0.0
      %2319 = vmatpush1.msra.mxu0 0.0
      %2320 = vmatprep.subr.mxu0 0.0
      %2321 = vmatpush1.msra.mxu0 0.0
      %2322 = vmatprep.subr.mxu0 0.0
      %2323 = vmatpush1.msra.mxu0 0.0
      %2324 = vmatprep.subr.mxu0 0.0
      %2325 = vmatpush1.msra.mxu0 0.0
      %2326 = vmatprep.subr.mxu0 0.0
      %2327 = vmatpush1.msra.mxu0 0.0
      %2328 = vmatprep.subr.mxu0 0.0
      %2329 = vmatpush1.msra.mxu0 0.0
      %2330 = vmatprep.subr.mxu0 0.0
      %2331 = vmatpush1.msra.mxu0 0.0
      %2332 = vmatprep.subr.mxu0 0.0
      %2333 = vmatpush1.msra.mxu0 0.0
      %2334 = vmatprep.subr.mxu0 0.0
      %2335 = vmatpush1.msra.mxu0 0.0
      %2336 = vmatprep.subr.mxu0 0.0
      %2337 = vmatpush1.msra.mxu0 0.0
      %2338 = vmatprep.subr.mxu0 0.0
      %2339 = vmatpush1.msra.mxu0 0.0
      %2340 = vmatprep.subr.mxu0 0.0
      %2341 = vmatpush1.msra.mxu0 0.0
      %2342 = vmatprep.subr.mxu0 0.0
      %2343 = vmatpush1.msra.mxu0 0.0
      %2344 = vmatprep.subr.mxu0 0.0
      %2345 = vmatpush1.msra.mxu0 0.0
      %2346 = vmatprep.mubr.f32.mxu0 0.0
      %2347 = vmatmul.mubr.f32.gmra.mrb[0].mxu0 %v2259
      %v2348 = vpop.f32.mrb[0].mxu0
      %v2349 = vadd.f32 0.0, %v2348
      %v2350 = vpop.f32.mrb[0].mxu0
      %2351 = vmatprep.mubr.f32.mxu0 0.0
      %2352 = vmatmul.mubr.f32.gmra.mrb[0].mxu0 %v2262
      %v2353 = vpop.f32.mrb[0].mxu0
      %v2354 = vadd.f32 0.0, %v2353
      %v2355 = vpop.f32.mrb[0].mxu0
      %2356 = vmatprep.mubr.f32.mxu0 0.0
      %2357 = vmatmul.mubr.f32.gmra.mrb[0].mxu0 %v2265
      %v2358 = vpop.f32.mrb[0].mxu0
      %v2359 = vadd.f32 0.0, %v2358
      %v2360 = vpop.f32.mrb[0].mxu0
      %2361 = vmatprep.mubr.f32.mxu0 0.0
      %2362 = vmatmul.mubr.f32.gmra.mrb[0].mxu0 %v2268
      %v2363 = vpop.f32.mrb[0].mxu0
      %v2364 = vadd.f32 0.0, %v2363
      %v2365 = vpop.f32.mrb[0].mxu0
      %2366 = vmatprep.mubr.f32.mxu0 0.0
      %2367 = vmatmul.mubr.f32.gmra.mrb[0].mxu0 %v2271
      %v2368 = vpop.f32.mrb[0].mxu0
      %v2369 = vadd.f32 0.0, %v2368
      %v2370 = vpop.f32.mrb[0].mxu0
      %2371 = vmatprep.mubr.f32.mxu0 0.0
      %2372 = vmatmul.mubr.f32.gmra.mrb[0].mxu0 %v2274
      %v2373 = vpop.f32.mrb[0].mxu0
      %v2374 = vadd.f32 0.0, %v2373
      %v2375 = vpop.f32.mrb[0].mxu0
      %2376 = vmatprep.mubr.f32.mxu0 0.0
      %2377 = vmatmul.mubr.f32.gmra.mrb[0].mxu0 %v2277
      %v2378 = vpop.f32.mrb[0].mxu0
      %v2379 = vadd.f32 0.0, %v2378
      %v2380 = vpop.f32.mrb[0].mxu0
      %2381 = vmatprep.mubr.f32.mxu0 0.0
      %2382 = vmatmul.mubr.f32.gmra.mrb[0].mxu0 %v2280
      %v2383 = vpop.f32.mrb[0].mxu0
      %v2384 = vadd.f32 0.0, %v2383
      %v2385 = vpop.f32.mrb[0].mxu0
      %2386 = vdwg.mxu0
      %v2387 = vadd.f32 %v2242, %v2349
      %v2388 = vadd.f32 %v2243, %v2354
      %v2389 = vadd.f32 %v2244, %v2359
      %v2390 = vadd.f32 %v2245, %v2364
      %v2391 = vadd.f32 %v2246, %v2369
      %v2392 = vadd.f32 %v2247, %v2374
      %v2393 = vadd.f32 %v2248, %v2379
      %v2394 = vadd.f32 %v2249, %v2384
      %s2395 = scalar_lea.vmem %s4, 128
      %v2396 = vld [vmem:[%s2395] sm:$0xff]
      %v2397 = vld [vmem:[%s2395 + $0x8] sm:$0xff]
      %v2398 = vld [vmem:[%s2395 + $0x10] sm:$0xff]
      %v2399 = vld [vmem:[%s2395 + $0x18] sm:$0xff]
      %v2400 = vld [vmem:[%s2395 + $0x20] sm:$0xff]
      %v2401 = vld [vmem:[%s2395 + $0x28] sm:$0xff]
      %v2402 = vld [vmem:[%s2395 + $0x30] sm:$0xff]
      %v2403 = vld [vmem:[%s2395 + $0x38] sm:$0xff]
      %v2405 = vsel %vm344, %v1723, 0
      %v2408 = vsel %vm344, %v1724, 0
      %v2411 = vsel %vm344, %v1725, 0
      %v2414 = vsel %vm344, %v1726, 0
      %v2417 = vsel %vm344, %v1727, 0
      %v2420 = vsel %vm344, %v1728, 0
      %v2423 = vsel %vm344, %v1729, 0
      %v2426 = vsel %vm344, %v1730, 0
      %2428 = vmatprep.subr.mxu0 0.0
      %2429 = vmatpush1.msra.mxu0 %v2396
      %2430 = vmatprep.subr.mxu0 0.0
      %2431 = vmatpush1.msra.mxu0 %v2397
      %2432 = vmatprep.subr.mxu0 0.0
      %2433 = vmatpush1.msra.mxu0 %v2398
      %2434 = vmatprep.subr.mxu0 0.0
      %2435 = vmatpush1.msra.mxu0 %v2399
      %2436 = vmatprep.subr.mxu0 0.0
      %2437 = vmatpush1.msra.mxu0 %v2400
      %2438 = vmatprep.subr.mxu0 0.0
      %2439 = vmatpush1.msra.mxu0 %v2401
      %2440 = vmatprep.subr.mxu0 0.0
      %2441 = vmatpush1.msra.mxu0 %v2402
      %2442 = vmatprep.subr.mxu0 0.0
      %2443 = vmatpush1.msra.mxu0 %v2403
      %2444 = vmatprep.subr.mxu0 0.0
      %2445 = vmatpush1.msra.mxu0 0.0
      %2446 = vmatprep.subr.mxu0 0.0
      %2447 = vmatpush1.msra.mxu0 0.0
      %2448 = vmatprep.subr.mxu0 0.0
      %2449 = vmatpush1.msra.mxu0 0.0
      %2450 = vmatprep.subr.mxu0 0.0
      %2451 = vmatpush1.msra.mxu0 0.0
      %2452 = vmatprep.subr.mxu0 0.0
      %2453 = vmatpush1.msra.mxu0 0.0
      %2454 = vmatprep.subr.mxu0 0.0
      %2455 = vmatpush1.msra.mxu0 0.0
      %2456 = vmatprep.subr.mxu0 0.0
      %2457 = vmatpush1.msra.mxu0 0.0
      %2458 = vmatprep.subr.mxu0 0.0
      %2459 = vmatpush1.msra.mxu0 0.0
      %2460 = vmatprep.subr.mxu0 0.0
      %2461 = vmatpush1.msra.mxu0 0.0
      %2462 = vmatprep.subr.mxu0 0.0
      %2463 = vmatpush1.msra.mxu0 0.0
      %2464 = vmatprep.subr.mxu0 0.0
      %2465 = vmatpush1.msra.mxu0 0.0
      %2466 = vmatprep.subr.mxu0 0.0
      %2467 = vmatpush1.msra.mxu0 0.0
      %2468 = vmatprep.subr.mxu0 0.0
      %2469 = vmatpush1.msra.mxu0 0.0
      %2470 = vmatprep.subr.mxu0 0.0
      %2471 = vmatpush1.msra.mxu0 0.0
      %2472 = vmatprep.subr.mxu0 0.0
      %2473 = vmatpush1.msra.mxu0 0.0
      %2474 = vmatprep.subr.mxu0 0.0
      %2475 = vmatpush1.msra.mxu0 0.0
      %2476 = vmatprep.subr.mxu0 0.0
      %2477 = vmatpush1.msra.mxu0 0.0
      %2478 = vmatprep.subr.mxu0 0.0
      %2479 = vmatpush1.msra.mxu0 0.0
      %2480 = vmatprep.subr.mxu0 0.0
      %2481 = vmatpush1.msra.mxu0 0.0
      %2482 = vmatprep.subr.mxu0 0.0
      %2483 = vmatpush1.msra.mxu0 0.0
      %2484 = vmatprep.subr.mxu0 0.0
      %2485 = vmatpush1.msra.mxu0 0.0
      %2486 = vmatprep.subr.mxu0 0.0
      %2487 = vmatpush1.msra.mxu0 0.0
      %2488 = vmatprep.subr.mxu0 0.0
      %2489 = vmatpush1.msra.mxu0 0.0
      %2490 = vmatprep.subr.mxu0 0.0
      %2491 = vmatpush1.msra.mxu0 0.0
      %2492 = vmatprep.mubr.f32.mxu0 0.0
      %2493 = vmatmul.mubr.f32.gmra.mrb[0].mxu0 %v2405
      %v2494 = vpop.f32.mrb[0].mxu0
      %v2495 = vadd.f32 0.0, %v2494
      %v2496 = vpop.f32.mrb[0].mxu0
      %2497 = vmatprep.mubr.f32.mxu0 0.0
      %2498 = vmatmul.mubr.f32.gmra.mrb[0].mxu0 %v2408
      %v2499 = vpop.f32.mrb[0].mxu0
      %v2500 = vadd.f32 0.0, %v2499
      %v2501 = vpop.f32.mrb[0].mxu0
      %2502 = vmatprep.mubr.f32.mxu0 0.0
      %2503 = vmatmul.mubr.f32.gmra.mrb[0].mxu0 %v2411
      %v2504 = vpop.f32.mrb[0].mxu0
      %v2505 = vadd.f32 0.0, %v2504
      %v2506 = vpop.f32.mrb[0].mxu0
      %2507 = vmatprep.mubr.f32.mxu0 0.0
      %2508 = vmatmul.mubr.f32.gmra.mrb[0].mxu0 %v2414
      %v2509 = vpop.f32.mrb[0].mxu0
      %v2510 = vadd.f32 0.0, %v2509
      %v2511 = vpop.f32.mrb[0].mxu0
      %2512 = vmatprep.mubr.f32.mxu0 0.0
      %2513 = vmatmul.mubr.f32.gmra.mrb[0].mxu0 %v2417
      %v2514 = vpop.f32.mrb[0].mxu0
      %v2515 = vadd.f32 0.0, %v2514
      %v2516 = vpop.f32.mrb[0].mxu0
      %2517 = vmatprep.mubr.f32.mxu0 0.0
      %2518 = vmatmul.mubr.f32.gmra.mrb[0].mxu0 %v2420
      %v2519 = vpop.f32.mrb[0].mxu0
      %v2520 = vadd.f32 0.0, %v2519
      %v2521 = vpop.f32.mrb[0].mxu0
      %2522 = vmatprep.mubr.f32.mxu0 0.0
      %2523 = vmatmul.mubr.f32.gmra.mrb[0].mxu0 %v2423
      %v2524 = vpop.f32.mrb[0].mxu0
      %v2525 = vadd.f32 0.0, %v2524
      %v2526 = vpop.f32.mrb[0].mxu0
      %2527 = vmatprep.mubr.f32.mxu0 0.0
      %2528 = vmatmul.mubr.f32.gmra.mrb[0].mxu0 %v2426
      %v2529 = vpop.f32.mrb[0].mxu0
      %v2530 = vadd.f32 0.0, %v2529
      %v2531 = vpop.f32.mrb[0].mxu0
      %2532 = vdwg.mxu0
      %v2533 = vadd.f32 %v2387, %v2495
      %v2534 = vadd.f32 %v2388, %v2500
      %v2535 = vadd.f32 %v2389, %v2505
      %v2536 = vadd.f32 %v2390, %v2510
      %v2537 = vadd.f32 %v2391, %v2515
      %v2538 = vadd.f32 %v2392, %v2520
      %v2539 = vadd.f32 %v2393, %v2525
      %v2540 = vadd.f32 %v2394, %v2530
      %vm2541 = vcmp.gt.f32.partialorder %v2533, 0.0
      %vm2542 = vcmp.gt.f32.partialorder %v2534, 0.0
      %vm2543 = vcmp.gt.f32.partialorder %v2535, 0.0
      %vm2544 = vcmp.gt.f32.partialorder %v2536, 0.0
      %vm2545 = vcmp.gt.f32.partialorder %v2537, 0.0
      %vm2546 = vcmp.gt.f32.partialorder %v2538, 0.0
      %vm2547 = vcmp.gt.f32.partialorder %v2539, 0.0
      %vm2548 = vcmp.gt.f32.partialorder %v2540, 0.0
      %v2549 = vmul.f32 %v2533, 0.1
      %v2550 = vmul.f32 %v2534, 0.1
      %v2551 = vmul.f32 %v2535, 0.1
      %v2552 = vmul.f32 %v2536, 0.1
      %v2553 = vmul.f32 %v2537, 0.1
      %v2554 = vmul.f32 %v2538, 0.1
      %v2555 = vmul.f32 %v2539, 0.1
      %v2556 = vmul.f32 %v2540, 0.1
      %v2557 = vsel %vm2541, %v2533, %v2549
      %v2558 = vsel %vm2542, %v2534, %v2550
      %v2559 = vsel %vm2543, %v2535, %v2551
      %v2560 = vsel %vm2544, %v2536, %v2552
      %v2561 = vsel %vm2545, %v2537, %v2553
      %v2562 = vsel %vm2546, %v2538, %v2554
      %v2563 = vsel %vm2547, %v2539, %v2555
      %v2564 = vsel %vm2548, %v2540, %v2556
      %2565 = vst [vmem:[%s248] sm:$0xff] %v2557
      %2566 = vst [vmem:[%s248 + $0x8] sm:$0xff] %v2558
      %2567 = vst [vmem:[%s248 + $0x10] sm:$0xff] %v2559
      %2568 = vst [vmem:[%s248 + $0x18] sm:$0xff] %v2560
      %2569 = vst [vmem:[%s248 + $0x20] sm:$0xff] %v2561
      %2570 = vst [vmem:[%s248 + $0x28] sm:$0xff] %v2562
      %2571 = vst [vmem:[%s248 + $0x30] sm:$0xff] %v2563
      %2572 = vst [vmem:[%s248 + $0x38] sm:$0xff] %v2564
      %s2573 = smul.u32 8, %s16
      %p2574 = scmp.lt.s32.totalorder %s2573, 15
      %s2575 = scalar_select %p2574, %s2573, 15
      %s2576 = smul.addr %s2575, 8
      %s2577 = scalar_lea.vmem %s5, %s2576
      // Predicated region
      $region41: #{decoder_block_forward.1} parent=39 // pred_check
        %p2578 = pneg %p149
      $region42: #{decoder_block_forward.1} parent=39 // pred_check_branch
        %2580 = sbr.rel (%p2578) target = $region44
      $region43: #{decoder_block_forward.1} parent=39 // pred_region
        %s2581 = smul.u32 8, %s16
      $region44: #{decoder_block_forward.1} parent=39 // pred_fallthru
        _
    $region40: #{decoder_block_forward.1} parent=5 // pred_fallthru
      _
    %p2582 = scmp.le.s32.totalorder 2, %s11
    // Predicated region
    $region45: #{decoder_block_forward.1} parent=5 // pred_check
      %p2583 = pneg %p2582
    $region46: #{decoder_block_forward.1} parent=5 // pred_check_branch
      %2585 = sbr.rel (%p2583) target = $region48
    $region47: #{decoder_block_forward.1} parent=5 // pred_region
      %s2586 = ssub.s32 %s11, 2
      // Predicated region
      $region49: #{decoder_block_forward.1} parent=47 // pred_check
        %p2587 = pneg %p155
      $region50: #{decoder_block_forward.1} parent=47 // pred_check_branch
        %2589 = sbr.rel (%p2587) target = $region52
      $region51: #{decoder_block_forward.1} parent=47 // pred_region
        %s2590 = smul.u32 8, %s17
        %p2591 = scmp.lt.s32.totalorder %s2590, 15
        %s2592 = scalar_select %p2591, %s2590, 15
        %s2593 = smul.addr %s2592, 8
        %s2594 = scalar_lea.vmem %s5, %s2593
      $region52: #{decoder_block_forward.1} parent=47 // pred_fallthru
        _
    $region48: #{decoder_block_forward.1} parent=5 // pred_fallthru
      _
  $region6: #{decoder_block_forward.1} parent=0 // loop_footer
    %s15 = sadd.s32 1, %s11
  $region7: #{decoder_block_forward.1} parent=0 // loop_footer_branch
    %10 = sbr.rel target = $region3
  $region8: #{decoder_block_forward.1} parent=0 // loop_exit
    _

</llo_original>
